<compile_context>
chip_gen: v6e
topology: v6e:2x2x1
jax: 0.10.0
libtpu: 0.0.40
codegen_flags: <defaults>
</compile_context>

<pallas_src>
import jax
import jax.numpy as jnp
from jax.experimental import pallas as pl
from jax.experimental.pallas import tpu as pltpu

_LANE = 128
_PACK = 8 * _LANE  # 1024: batch-tile granule keeping (8,128)-divisible blocks


def _round_up(x, m):
    return ((x + m - 1) // m) * m


def _mlp_kernel_o1(x_ref, w1_ref, b1_ref, w2r_ref, b2_ref, o_ref):
    """Per-tile MLP for n_output == 1 with a lane-dense output slab.

    Layer 1 runs on the MXU with f32 accumulation.  Layer 2 has N == 1 (a
    wasteful 1/128-lane MXU matmul), so it is a VPU multiply against the
    (1, H) weight row plus an XLU lane reduction.  The per-row scalars are
    re-laid out to (TILE_B//128, 128) so the store is full-lane / unmasked.
    """
    h = jnp.dot(x_ref[...], w1_ref[...], preferred_element_type=jnp.float32)
    h = jnp.maximum(h + b1_ref[...], 0.0)                 # bias + ReLU (f32 VPU)
    y = jnp.sum(h * w2r_ref[...], axis=-1)                # (TILE_B,)
    y = y.reshape(o_ref.shape) + b2_ref[...]              # (TILE_B//128, 128)
    o_ref[...] = y.astype(o_ref.dtype)


def _mlp_kernel_mxu(x_ref, w1_ref, b1_ref, w2_ref, b2_ref, o_ref):
    """Per-tile MLP for general n_output: both layers on the MXU."""
    h = jnp.dot(x_ref[...], w1_ref[...], preferred_element_type=jnp.float32)
    h = jnp.maximum(h + b1_ref[...], 0.0)
    y = jnp.dot(h, w2_ref[...], preferred_element_type=jnp.float32)
    o_ref[...] = (y + b2_ref[...]).astype(o_ref.dtype)


def net_forward(x, w1, b1, w2, b2, *, tile_b=8192):
    """Pallas forward pass of Net.

    x  : (B, n_feature)          f32 (or bf16 fast path)
    w1 : (n_feature, n_hidden)   f32  (transposed vs. PyTorch's (out, in))
    b1 : (n_hidden,)             f32
    w2 : (n_hidden, n_output)    f32
    b2 : (n_output,)             f32
    returns (B,) if n_output == 1 else (B, n_output)   [== torch squeeze(-1)]
    """
    B, F = x.shape
    Fw, H = w1.shape
    Hw, O = w2.shape
    assert F == Fw and H == Hw

    # dtype plumbing: torch does x.float(); bf16 x keeps a native bf16 MXU path.
    if x.dtype == jnp.bfloat16:
        w1c = w1.astype(jnp.bfloat16)
    else:
        x = x.astype(jnp.float32)
        w1c = w1.astype(jnp.float32)
    b1_2d = b1.reshape(1, H).astype(jnp.float32)

    # Batch tile: multiple of 1024 so the lane-dense out block keeps
    # (8,128)-divisible dims; capped at ~ceil(B/2) so large batches always use
    # >= 2 grid steps (v7x megacore).  No jnp.pad: last block is clipped.
    TILE_B = max(_PACK, min(_round_up(tile_b, _PACK),
                            _round_up(pl.cdiv(B, 2), _PACK)))
    grid = (pl.cdiv(B, TILE_B),)

    x_spec = pl.BlockSpec((TILE_B, F), lambda i: (i, 0))
    w1_spec = pl.BlockSpec((F, H), lambda i: (0, 0))       # VMEM-resident
    b1_spec = pl.BlockSpec((1, H), lambda i: (0, 0))

    if O == 1:
        kernel = _mlp_kernel_o1
        w2_arg = w2.reshape(1, H).astype(jnp.float32)      # (1, H) weight row
        w2_spec = pl.BlockSpec((1, H), lambda i: (0, 0))
        b2_arg = b2.reshape(1, 1).astype(jnp.float32)
        b2_spec = pl.BlockSpec((1, 1), lambda i: (0, 0))
        # Lane-dense output slab: flat index t lives at (t // 128, t % 128).
        rows = pl.cdiv(B, _LANE)
        out_shape = jax.ShapeDtypeStruct((rows, _LANE), jnp.float32)
        out_spec = pl.BlockSpec((TILE_B // _LANE, _LANE), lambda i: (i, 0))
    else:
        kernel = _mlp_kernel_mxu
        w2_arg = w2.astype(jnp.float32)
        w2_spec = pl.BlockSpec((H, O), lambda i: (0, 0))
        b2_arg = b2.reshape(1, O).astype(jnp.float32)
        b2_spec = pl.BlockSpec((1, O), lambda i: (0, 0))
        out_shape = jax.ShapeDtypeStruct((B, O), jnp.float32)
        out_spec = pl.BlockSpec((TILE_B, O), lambda i: (i, 0))

    itemsize = jnp.dtype(x.dtype).itemsize
    cost = pl.CostEstimate(
        flops=2 * B * F * H + 2 * B * H * O,
        transcendentals=0,
        bytes_accessed=(B * F * itemsize                  # x in
                        + B * O * 4                       # y out
                        + (F * H + H + H * O + O) * 4),   # resident weights
    )

    # Scoped-VMEM budget: double-buffered lane-padded x tile + f32 intermediate
    # strips; clamp to [32 MiB, 48 MiB] — safe on v5e/v6e (128 MiB physical)
    # and under v7x's 64 MiB per TensorCore.
    est = 2 * TILE_B * _LANE * itemsize + 6 * TILE_B * _LANE * 4 + (4 << 20)
    vmem_limit = int(min(max(est, 32 << 20), 48 << 20))

    out = pl.pallas_call(
        kernel,
        out_shape=out_shape,
        grid=grid,
        in_specs=[x_spec, w1_spec, b1_spec, w2_spec, b2_spec],
        out_specs=out_spec,
        compiler_params=pltpu.CompilerParams(
            dimension_semantics=("parallel",),   # shard batch tiles across TCs
            vmem_limit_bytes=vmem_limit,
        ),
        cost_estimate=cost,
    )(x, w1c, b1_2d, w2_arg, b2_arg)

    if O == 1:
        return out.reshape(-1)[:B]               # slab -> (B,)  (torch squeeze(-1))
    return out


def init_params(key, n_feature, n_hidden, n_output):
    """torch.nn.Linear default init: U[-1/sqrt(fan_in), 1/sqrt(fan_in)]."""
    k1, k2, k3, k4 = jax.random.split(key, 4)
    bound1 = 1.0 / jnp.sqrt(jnp.float32(n_feature))
    bound2 = 1.0 / jnp.sqrt(jnp.float32(n_hidden))
    # Stored as (in, out) == transpose of PyTorch's (out, in) weight layout.
    w1 = jax.random.uniform(k1, (n_feature, n_hidden), jnp.float32, -bound1, bound1)
    b1 = jax.random.uniform(k2, (n_hidden,), jnp.float32, -bound1, bound1)
    w2 = jax.random.uniform(k3, (n_hidden, n_output), jnp.float32, -bound2, bound2)
    b2 = jax.random.uniform(k4, (n_output,), jnp.float32, -bound2, bound2)
    return w1, b1, w2, b2


def _ref_forward(x, w1, b1, w2, b2):
    x = x.astype(jnp.float32)
    h = jnp.maximum(jnp.dot(x, w1, precision="highest") + b1, 0.0)
    y = jnp.dot(h, w2, precision="highest") + b2
    return y[:, 0] if w2.shape[1] == 1 else y


if __name__ == "__main__":
    # Shapes consistent with the module: Net(n_feature=16, n_hidden=32, n_output=1)
    n_feature, n_hidden, n_output = 16, 32, 1
    key = jax.random.PRNGKey(0)
    kx1, kx2, kp, kp2 = jax.random.split(key, 4)
    w1, b1, w2, b2 = init_params(kp, n_feature, n_hidden, n_output)

    # Tolerance covers possible reduced-precision MXU passes in default XLA dots.
    TOL = dict(atol=2e-2, rtol=2e-2)

    # --- case 1: tiny batch (single partial tile, lane-dense O==1 path) ---
    B1 = 8
    x1 = jax.random.normal(kx1, (B1, n_feature), dtype=jnp.float32)
    y1 = jax.block_until_ready(net_forward(x1, w1, b1, w2, b2))
    assert y1.shape == (B1,)
    assert jnp.allclose(y1, _ref_forward(x1, w1, b1, w2, b2), **TOL)

    # --- case 2: multi-tile batch with a remainder (no pad, clipped last block) ---
    B2 = 2500
    x2 = jax.random.normal(kx2, (B2, n_feature), dtype=jnp.float32)
    y2 = jax.block_until_ready(net_forward(x2, w1, b1, w2, b2))
    assert y2.shape == (B2,)
    assert jnp.allclose(y2, _ref_forward(x2, w1, b1, w2, b2), **TOL)

    # --- case 3: general n_output > 1 path (both layers on the MXU) ---
    w1b, b1b, w2b, b2b = init_params(kp2, n_feature, n_hidden, 3)
    y3 = jax.block_until_ready(net_forward(x2, w1b, b1b, w2b, b2b))
    assert y3.shape == (B2, 3)
    assert jnp.allclose(y3, _ref_forward(x2, w1b, b1b, w2b, b2b), **TOL)

    print("KERNEL_OK")
</pallas_src>

<mosaic_0001>
module attributes {stable_mosaic.version = 11 : i64} {
  func.func @_mlp_kernel_o1(%arg0: i32, %arg1: memref<1024x16xf32, #tpu.memory_space<vmem>>, %arg2: memref<16x32xf32, #tpu.memory_space<vmem>>, %arg3: memref<1x32xf32, #tpu.memory_space<vmem>>, %arg4: memref<1x32xf32, #tpu.memory_space<vmem>>, %arg5: memref<1x1xf32, #tpu.memory_space<vmem>>, %arg6: memref<8x128xf32, #tpu.memory_space<vmem>>) attributes {dimension_semantics = [#tpu.dimension_semantics<parallel>], iteration_bounds = array<i64: 1>, scalar_prefetch = 0 : i64, scratch_operands = 0 : i64, tpu.core_type = #tpu.core_type<tc>, window_params = [{transform_indices = @transform_0, window_bounds = array<i64: 1024, 16>}, {pipeline_mode = #tpu.pipeline_mode<synchronous>, transform_indices = @transform_1, window_bounds = array<i64: 16, 32>}, {pipeline_mode = #tpu.pipeline_mode<synchronous>, transform_indices = @transform_2, window_bounds = array<i64: 1, 32>}, {pipeline_mode = #tpu.pipeline_mode<synchronous>, transform_indices = @transform_3, window_bounds = array<i64: 1, 32>}, {pipeline_mode = #tpu.pipeline_mode<synchronous>, transform_indices = @transform_4, window_bounds = array<i64: 1, 1>}, {transform_indices = @transform_5, window_bounds = array<i64: 8, 128>}]} {
    %c0 = arith.constant 0 : index
    %c0_0 = arith.constant 0 : index
    %0 = vector.load %arg1[%c0, %c0_0] : memref<1024x16xf32, #tpu.memory_space<vmem>>, vector<1024x16xf32>
    %c0_1 = arith.constant 0 : index
    %c0_2 = arith.constant 0 : index
    %1 = vector.load %arg2[%c0_1, %c0_2] : memref<16x32xf32, #tpu.memory_space<vmem>>, vector<16x32xf32>
    %cst = arith.constant dense<0.000000e+00> : vector<1024x32xf32>
    %2 = tpu.matmul %0, %1, %cst {dimension_numbers = #tpu.dot_dimension_numbers<[1], [0], [0], [1], [0, 0, 1, 1], [], []>} : vector<1024x16xf32>, vector<16x32xf32>, vector<1024x32xf32> -> vector<1024x32xf32>
    %c0_3 = arith.constant 0 : index
    %c0_4 = arith.constant 0 : index
    %3 = vector.load %arg3[%c0_3, %c0_4] : memref<1x32xf32, #tpu.memory_space<vmem>>, vector<1x32xf32>
    %4 = vector.broadcast %3 : vector<1x32xf32> to vector<1024x32xf32>
    %5 = arith.addf %2, %4 : vector<1024x32xf32>
    %cst_5 = arith.constant 0.000000e+00 : f32
    %6 = vector.broadcast %cst_5 : f32 to vector<1024x32xf32>
    %7 = arith.maximumf %5, %6 : vector<1024x32xf32>
    %c0_6 = arith.constant 0 : index
    %c0_7 = arith.constant 0 : index
    %8 = vector.load %arg4[%c0_6, %c0_7] : memref<1x32xf32, #tpu.memory_space<vmem>>, vector<1x32xf32>
    %9 = vector.broadcast %8 : vector<1x32xf32> to vector<1024x32xf32>
    %10 = arith.mulf %7, %9 : vector<1024x32xf32>
    %cst_8 = arith.constant dense<0.000000e+00> : vector<1024xf32>
    %11 = vector.multi_reduction <add>, %10, %cst_8 [1] : vector<1024x32xf32> to vector<1024xf32>
    %12 = vector.shape_cast %11 : vector<1024xf32> to vector<8x128xf32>
    %c0_9 = arith.constant 0 : index
    %c0_10 = arith.constant 0 : index
    %13 = vector.load %arg5[%c0_9, %c0_10] : memref<1x1xf32, #tpu.memory_space<vmem>>, vector<1x1xf32>
    %14 = vector.broadcast %13 : vector<1x1xf32> to vector<8x128xf32>
    %15 = arith.addf %12, %14 : vector<8x128xf32>
    %c0_11 = arith.constant 0 : index
    %c0_12 = arith.constant 0 : index
    %16 = vector.load %arg6[%c0_11, %c0_12] : memref<8x128xf32, #tpu.memory_space<vmem>>, vector<8x128xf32>
    tpu.vector_store %arg6[%c0_11, %c0_12], %15 {strides = array<i32>} : memref<8x128xf32, #tpu.memory_space<vmem>>, vector<8x128xf32>,
    return
  }
  func.func @transform_0(%arg0: i32) -> (i32, i32) {
    %c0_i32 = arith.constant 0 : i32
    %c0_i32_0 = arith.constant 0 : i32
    return %arg0, %c0_i32 : i32, i32
  }
  func.func @transform_1(%arg0: i32) -> (i32, i32) {
    %c0_i32 = arith.constant 0 : i32
    %c0_i32_0 = arith.constant 0 : i32
    %c0_i32_1 = arith.constant 0 : i32
    return %c0_i32, %c0_i32_0 : i32, i32
  }
  func.func @transform_2(%arg0: i32) -> (i32, i32) {
    %c0_i32 = arith.constant 0 : i32
    %c0_i32_0 = arith.constant 0 : i32
    %c0_i32_1 = arith.constant 0 : i32
    return %c0_i32, %c0_i32_0 : i32, i32
  }
  func.func @transform_3(%arg0: i32) -> (i32, i32) {
    %c0_i32 = arith.constant 0 : i32
    %c0_i32_0 = arith.constant 0 : i32
    %c0_i32_1 = arith.constant 0 : i32
    return %c0_i32, %c0_i32_0 : i32, i32
  }
  func.func @transform_4(%arg0: i32) -> (i32, i32) {
    %c0_i32 = arith.constant 0 : i32
    %c0_i32_0 = arith.constant 0 : i32
    %c0_i32_1 = arith.constant 0 : i32
    return %c0_i32, %c0_i32_0 : i32, i32
  }
  func.func @transform_5(%arg0: i32) -> (i32, i32) {
    %c0_i32 = arith.constant 0 : i32
    %c0_i32_0 = arith.constant 0 : i32
    return %arg0, %c0_i32 : i32, i32
  }
}

</mosaic_0001>

<llo_original>
// kernel: tpu_custom_call.1
$region0: #{tpu_custom_call.1}
  #allocation0 [shape = 'u32[]', space=smem, size = 0x4, offset = 0x4, fixed_abs, tag = 'smem constant byte address 0x4 - core index']
  #allocation1 [shape = 'u32[144,128]{1,0:T(1,128)}', space=vmem, size = 0x12000, scoped, tag = 'internal scratch']
  #allocation2 [shape = 'f32[1,1]{1,0:T(1,128)S(1)}', space=vmem, size = 0x200, scoped, tag = 'scoped memory for tpu_custom_call.1']
  %s0 = inlined_call_operand.hbm [shape: f32[8,16], index: 0, kind: input, shape index: {}]
  %s1 = inlined_call_operand.hbm [shape: f32[16,32], index: 1, kind: input, shape index: {}]
  %s2 = inlined_call_operand.vmem [shape: f32[1,32], index: 2, kind: input, shape index: {}]
  %s3 = inlined_call_operand.vmem [shape: f32[1,32], index: 3, kind: input, shape index: {}]
  %s4 = inlined_call_operand.<no memory space> [shape: f32[1,1], index: 4, kind: input, shape index: {}]
  %s5 = inlined_call_operand.hbm [shape: f32[1,128], index: 5, kind: output, shape index: {}]
  %s6 = sld [smem:[#allocation0]]
  $region38: #{tpu_custom_call.1} parent=0
    _
  %s8 = ssub.s32 1, %s6
  %s9 = scalar_select 0, %s8, %s6
  %v10 = vstv %s4
  %11 = vst [vmem:[#allocation2] sm:$0x1] %v10
  $region1: #{tpu_custom_call.1} parent=0
    #allocation3 [shape = 'u8[524288]{0}', space=vmem, size = 0x80000, scoped, tag = 'input window, operand 0, single buffered']
    #allocation4 [shape = 's32[1]{0}', space=sflag, size = 0x4, scoped, tag = 'scoped memory for tpu_custom_call.1']
    #allocation5 [shape = 's32[1]{0}', space=sflag, size = 0x4, scoped, tag = 'scoped memory for tpu_custom_call.1']
    #allocation6 [shape = 'u8[8192]{0}', space=vmem, size = 0x2000, scoped, tag = 'input window, operand 1, single buffered']
    #allocation7 [shape = 's32[1]{0}', space=sflag, size = 0x4, scoped, tag = 'scoped memory for tpu_custom_call.1']
    #allocation8 [shape = 'u8[4096]{0}', space=vmem, size = 0x1000, scoped, tag = 'output window, operand 0, single buffered']
    %12 = vsyncpa [#allocation4], 0
    %13 = vsyncpa [#allocation7], 0
    %14 = vsyncpa [#allocation5], 0
    // Predicated region
    $region2: #{tpu_custom_call.1} parent=1 // pred_check
      _
    $region3: #{tpu_custom_call.1} parent=1 // pred_check_branch
      %16 = sbr.rel (0) target = $region5
    $region4: #{tpu_custom_call.1} parent=1 // pred_region
      %s18 = ssub.s32 16384, 128
      %19 = vsyncadd [#allocation4], %s18
      %s20 = sshll.u32 [#allocation3], 4
      %s21 = int_to_ptr.vmem [resolvable:$true] %s20
      %26 = dma.hbm_to_vmem [thread:$0]  %s0, 128, %s21, [#allocation4], 128, 128, 8
    $region5: #{tpu_custom_call.1} parent=1 // pred_fallthru
      _
    // Predicated region
    $region6: #{tpu_custom_call.1} parent=1 // pred_check
      _
    $region7: #{tpu_custom_call.1} parent=1 // pred_check_branch
      %28 = sbr.rel (0) target = $region9
    $region8: #{tpu_custom_call.1} parent=1 // pred_region
      %s30 = ssub.s32 256, 256
      %31 = vsyncadd [#allocation7], %s30
      %s32 = sshll.u32 [#allocation6], 4
      %s33 = int_to_ptr.vmem [resolvable:$true] %s32
      %38 = dma.hbm_to_vmem [thread:$0]  %s1, 256, %s33, [#allocation7], 128, 128, 8
    $region9: #{tpu_custom_call.1} parent=1 // pred_fallthru
      _
    // Predicated region
    $region10: #{tpu_custom_call.1} parent=1 // pred_check
      _
    $region11: #{tpu_custom_call.1} parent=1 // pred_check_branch
      %40 = sbr.rel (0) target = $region13
    $region12: #{tpu_custom_call.1} parent=1 // pred_region
      _
    $region13: #{tpu_custom_call.1} parent=1 // pred_fallthru
      _
    // Predicated region
    $region14: #{tpu_custom_call.1} parent=1 // pred_check
      _
    $region15: #{tpu_custom_call.1} parent=1 // pred_check_branch
      %42 = sbr.rel (0) target = $region17
    $region16: #{tpu_custom_call.1} parent=1 // pred_region
      _
    $region17: #{tpu_custom_call.1} parent=1 // pred_fallthru
      _
    // Predicated region
    $region18: #{tpu_custom_call.1} parent=1 // pred_check
      _
    $region19: #{tpu_custom_call.1} parent=1 // pred_check_branch
      %44 = sbr.rel (0) target = $region21
    $region20: #{tpu_custom_call.1} parent=1 // pred_region
      _
    $region21: #{tpu_custom_call.1} parent=1 // pred_fallthru
      _
    // Predicated region
    $region22: #{tpu_custom_call.1} parent=1 // pred_check
      _
    $region23: #{tpu_custom_call.1} parent=1 // pred_check_branch
      %46 = sbr.rel (0) target = $region25
    $region24: #{tpu_custom_call.1} parent=1 // pred_region
      %47 = dma.done [#allocation4], 16384
    $region25: #{tpu_custom_call.1} parent=1 // pred_fallthru
      _
    // Predicated region
    $region26: #{tpu_custom_call.1} parent=1 // pred_check
      _
    $region27: #{tpu_custom_call.1} parent=1 // pred_check_branch
      %49 = sbr.rel (0) target = $region29
    $region28: #{tpu_custom_call.1} parent=1 // pred_region
      %50 = dma.done [#allocation7], 256
    $region29: #{tpu_custom_call.1} parent=1 // pred_fallthru
      _
    %v51 = vld [vmem:[#allocation3] sm:$0xff]
    %v52 = vld [vmem:[#allocation3 + $0x8] sm:$0xff]
    %v53 = vld [vmem:[#allocation3 + $0x10] sm:$0xff]
    %v54 = vld [vmem:[#allocation3 + $0x18] sm:$0xff]
    %v55 = vld [vmem:[#allocation3 + $0x20] sm:$0xff]
    %v56 = vld [vmem:[#allocation3 + $0x28] sm:$0xff]
    %v57 = vld [vmem:[#allocation3 + $0x30] sm:$0xff]
    %v58 = vld [vmem:[#allocation3 + $0x38] sm:$0xff]
    %v59 = vld [vmem:[#allocation3 + $0x40] sm:$0xff]
    %v60 = vld [vmem:[#allocation3 + $0x48] sm:$0xff]
    %v61 = vld [vmem:[#allocation3 + $0x50] sm:$0xff]
    %v62 = vld [vmem:[#allocation3 + $0x58] sm:$0xff]
    %v63 = vld [vmem:[#allocation3 + $0x60] sm:$0xff]
    %v64 = vld [vmem:[#allocation3 + $0x68] sm:$0xff]
    %v65 = vld [vmem:[#allocation3 + $0x70] sm:$0xff]
    %v66 = vld [vmem:[#allocation3 + $0x78] sm:$0xff]
    %v67 = vld [vmem:[#allocation3 + $0x80] sm:$0xff]
    %v68 = vld [vmem:[#allocation3 + $0x88] sm:$0xff]
    %v69 = vld [vmem:[#allocation3 + $0x90] sm:$0xff]
    %v70 = vld [vmem:[#allocation3 + $0x98] sm:$0xff]
    %v71 = vld [vmem:[#allocation3 + $0xa0] sm:$0xff]
    %v72 = vld [vmem:[#allocation3 + $0xa8] sm:$0xff]
    %v73 = vld [vmem:[#allocation3 + $0xb0] sm:$0xff]
    %v74 = vld [vmem:[#allocation3 + $0xb8] sm:$0xff]
    %v75 = vld [vmem:[#allocation3 + $0xc0] sm:$0xff]
    %v76 = vld [vmem:[#allocation3 + $0xc8] sm:$0xff]
    %v77 = vld [vmem:[#allocation3 + $0xd0] sm:$0xff]
    %v78 = vld [vmem:[#allocation3 + $0xd8] sm:$0xff]
    %v79 = vld [vmem:[#allocation3 + $0xe0] sm:$0xff]
    %v80 = vld [vmem:[#allocation3 + $0xe8] sm:$0xff]
    %v81 = vld [vmem:[#allocation3 + $0xf0] sm:$0xff]
    %v82 = vld [vmem:[#allocation3 + $0xf8] sm:$0xff]
    %v83 = vld [vmem:[#allocation3 + $0x100] sm:$0xff]
    %v84 = vld [vmem:[#allocation3 + $0x108] sm:$0xff]
    %v85 = vld [vmem:[#allocation3 + $0x110] sm:$0xff]
    %v86 = vld [vmem:[#allocation3 + $0x118] sm:$0xff]
    %v87 = vld [vmem:[#allocation3 + $0x120] sm:$0xff]
    %v88 = vld [vmem:[#allocation3 + $0x128] sm:$0xff]
    %v89 = vld [vmem:[#allocation3 + $0x130] sm:$0xff]
    %v90 = vld [vmem:[#allocation3 + $0x138] sm:$0xff]
    %v91 = vld [vmem:[#allocation3 + $0x140] sm:$0xff]
    %v92 = vld [vmem:[#allocation3 + $0x148] sm:$0xff]
    %v93 = vld [vmem:[#allocation3 + $0x150] sm:$0xff]
    %v94 = vld [vmem:[#allocation3 + $0x158] sm:$0xff]
    %v95 = vld [vmem:[#allocation3 + $0x160] sm:$0xff]
    %v96 = vld [vmem:[#allocation3 + $0x168] sm:$0xff]
    %v97 = vld [vmem:[#allocation3 + $0x170] sm:$0xff]
    %v98 = vld [vmem:[#allocation3 + $0x178] sm:$0xff]
    %v99 = vld [vmem:[#allocation3 + $0x180] sm:$0xff]
    %v100 = vld [vmem:[#allocation3 + $0x188] sm:$0xff]
    %v101 = vld [vmem:[#allocation3 + $0x190] sm:$0xff]
    %v102 = vld [vmem:[#allocation3 + $0x198] sm:$0xff]
    %v103 = vld [vmem:[#allocation3 + $0x1a0] sm:$0xff]
    %v104 = vld [vmem:[#allocation3 + $0x1a8] sm:$0xff]
    %v105 = vld [vmem:[#allocation3 + $0x1b0] sm:$0xff]
    %v106 = vld [vmem:[#allocation3 + $0x1b8] sm:$0xff]
    %v107 = vld [vmem:[#allocation3 + $0x1c0] sm:$0xff]
    %v108 = vld [vmem:[#allocation3 + $0x1c8] sm:$0xff]
    %v109 = vld [vmem:[#allocation3 + $0x1d0] sm:$0xff]
    %v110 = vld [vmem:[#allocation3 + $0x1d8] sm:$0xff]
    %v111 = vld [vmem:[#allocation3 + $0x1e0] sm:$0xff]
    %v112 = vld [vmem:[#allocation3 + $0x1e8] sm:$0xff]
    %v113 = vld [vmem:[#allocation3 + $0x1f0] sm:$0xff]
    %v114 = vld [vmem:[#allocation3 + $0x1f8] sm:$0xff]
    %v115 = vld [vmem:[#allocation3 + $0x200] sm:$0xff]
    %v116 = vld [vmem:[#allocation3 + $0x208] sm:$0xff]
    %v117 = vld [vmem:[#allocation3 + $0x210] sm:$0xff]
    %v118 = vld [vmem:[#allocation3 + $0x218] sm:$0xff]
    %v119 = vld [vmem:[#allocation3 + $0x220] sm:$0xff]
    %v120 = vld [vmem:[#allocation3 + $0x228] sm:$0xff]
    %v121 = vld [vmem:[#allocation3 + $0x230] sm:$0xff]
    %v122 = vld [vmem:[#allocation3 + $0x238] sm:$0xff]
    %v123 = vld [vmem:[#allocation3 + $0x240] sm:$0xff]
    %v124 = vld [vmem:[#allocation3 + $0x248] sm:$0xff]
    %v125 = vld [vmem:[#allocation3 + $0x250] sm:$0xff]
    %v126 = vld [vmem:[#allocation3 + $0x258] sm:$0xff]
    %v127 = vld [vmem:[#allocation3 + $0x260] sm:$0xff]
    %v128 = vld [vmem:[#allocation3 + $0x268] sm:$0xff]
    %v129 = vld [vmem:[#allocation3 + $0x270] sm:$0xff]
    %v130 = vld [vmem:[#allocation3 + $0x278] sm:$0xff]
    %v131 = vld [vmem:[#allocation3 + $0x280] sm:$0xff]
    %v132 = vld [vmem:[#allocation3 + $0x288] sm:$0xff]
    %v133 = vld [vmem:[#allocation3 + $0x290] sm:$0xff]
    %v134 = vld [vmem:[#allocation3 + $0x298] sm:$0xff]
    %v135 = vld [vmem:[#allocation3 + $0x2a0] sm:$0xff]
    %v136 = vld [vmem:[#allocation3 + $0x2a8] sm:$0xff]
    %v137 = vld [vmem:[#allocation3 + $0x2b0] sm:$0xff]
    %v138 = vld [vmem:[#allocation3 + $0x2b8] sm:$0xff]
    %v139 = vld [vmem:[#allocation3 + $0x2c0] sm:$0xff]
    %v140 = vld [vmem:[#allocation3 + $0x2c8] sm:$0xff]
    %v141 = vld [vmem:[#allocation3 + $0x2d0] sm:$0xff]
    %v142 = vld [vmem:[#allocation3 + $0x2d8] sm:$0xff]
    %v143 = vld [vmem:[#allocation3 + $0x2e0] sm:$0xff]
    %v144 = vld [vmem:[#allocation3 + $0x2e8] sm:$0xff]
    %v145 = vld [vmem:[#allocation3 + $0x2f0] sm:$0xff]
    %v146 = vld [vmem:[#allocation3 + $0x2f8] sm:$0xff]
    %v147 = vld [vmem:[#allocation3 + $0x300] sm:$0xff]
    %v148 = vld [vmem:[#allocation3 + $0x308] sm:$0xff]
    %v149 = vld [vmem:[#allocation3 + $0x310] sm:$0xff]
    %v150 = vld [vmem:[#allocation3 + $0x318] sm:$0xff]
    %v151 = vld [vmem:[#allocation3 + $0x320] sm:$0xff]
    %v152 = vld [vmem:[#allocation3 + $0x328] sm:$0xff]
    %v153 = vld [vmem:[#allocation3 + $0x330] sm:$0xff]
    %v154 = vld [vmem:[#allocation3 + $0x338] sm:$0xff]
    %v155 = vld [vmem:[#allocation3 + $0x340] sm:$0xff]
    %v156 = vld [vmem:[#allocation3 + $0x348] sm:$0xff]
    %v157 = vld [vmem:[#allocation3 + $0x350] sm:$0xff]
    %v158 = vld [vmem:[#allocation3 + $0x358] sm:$0xff]
    %v159 = vld [vmem:[#allocation3 + $0x360] sm:$0xff]
    %v160 = vld [vmem:[#allocation3 + $0x368] sm:$0xff]
    %v161 = vld [vmem:[#allocation3 + $0x370] sm:$0xff]
    %v162 = vld [vmem:[#allocation3 + $0x378] sm:$0xff]
    %v163 = vld [vmem:[#allocation3 + $0x380] sm:$0xff]
    %v164 = vld [vmem:[#allocation3 + $0x388] sm:$0xff]
    %v165 = vld [vmem:[#allocation3 + $0x390] sm:$0xff]
    %v166 = vld [vmem:[#allocation3 + $0x398] sm:$0xff]
    %v167 = vld [vmem:[#allocation3 + $0x3a0] sm:$0xff]
    %v168 = vld [vmem:[#allocation3 + $0x3a8] sm:$0xff]
    %v169 = vld [vmem:[#allocation3 + $0x3b0] sm:$0xff]
    %v170 = vld [vmem:[#allocation3 + $0x3b8] sm:$0xff]
    %v171 = vld [vmem:[#allocation3 + $0x3c0] sm:$0xff]
    %v172 = vld [vmem:[#allocation3 + $0x3c8] sm:$0xff]
    %v173 = vld [vmem:[#allocation3 + $0x3d0] sm:$0xff]
    %v174 = vld [vmem:[#allocation3 + $0x3d8] sm:$0xff]
    %v175 = vld [vmem:[#allocation3 + $0x3e0] sm:$0xff]
    %v176 = vld [vmem:[#allocation3 + $0x3e8] sm:$0xff]
    %v177 = vld [vmem:[#allocation3 + $0x3f0] sm:$0xff]
    %v178 = vld [vmem:[#allocation3 + $0x3f8] sm:$0xff]
    %v179 = vld [vmem:[#allocation6] sm:$0xff]
    %v180 = vld [vmem:[#allocation6 + $0x8] sm:$0xff]
    %v181 = vld [vmem:[%s2] sm:$0x1]
    %v183 = vlaneseq
    %v184 = vshrl.u32 %v183, 7
    %v185 = vsub.s32 0, %v184
    %v186 = vrot.slane %v181, %v185
    %vm188 = vcmask 130048
    %v190 = vsel %vm188, %v51, 0
    %v193 = vsel %vm188, %v52, 0
    %v196 = vsel %vm188, %v53, 0
    %v199 = vsel %vm188, %v54, 0
    %v202 = vsel %vm188, %v55, 0
    %v205 = vsel %vm188, %v56, 0
    %v208 = vsel %vm188, %v57, 0
    %v211 = vsel %vm188, %v58, 0
    %v214 = vsel %vm188, %v59, 0
    %v217 = vsel %vm188, %v60, 0
    %v220 = vsel %vm188, %v61, 0
    %v223 = vsel %vm188, %v62, 0
    %v226 = vsel %vm188, %v63, 0
    %v229 = vsel %vm188, %v64, 0
    %v232 = vsel %vm188, %v65, 0
    %v235 = vsel %vm188, %v66, 0
    %v238 = vsel %vm188, %v67, 0
    %v241 = vsel %vm188, %v68, 0
    %v244 = vsel %vm188, %v69, 0
    %v247 = vsel %vm188, %v70, 0
    %v250 = vsel %vm188, %v71, 0
    %v253 = vsel %vm188, %v72, 0
    %v256 = vsel %vm188, %v73, 0
    %v259 = vsel %vm188, %v74, 0
    %v262 = vsel %vm188, %v75, 0
    %v265 = vsel %vm188, %v76, 0
    %v268 = vsel %vm188, %v77, 0
    %v271 = vsel %vm188, %v78, 0
    %v274 = vsel %vm188, %v79, 0
    %v277 = vsel %vm188, %v80, 0
    %v280 = vsel %vm188, %v81, 0
    %v283 = vsel %vm188, %v82, 0
    %v286 = vsel %vm188, %v83, 0
    %v289 = vsel %vm188, %v84, 0
    %v292 = vsel %vm188, %v85, 0
    %v295 = vsel %vm188, %v86, 0
    %v298 = vsel %vm188, %v87, 0
    %v301 = vsel %vm188, %v88, 0
    %v304 = vsel %vm188, %v89, 0
    %v307 = vsel %vm188, %v90, 0
    %v310 = vsel %vm188, %v91, 0
    %v313 = vsel %vm188, %v92, 0
    %v316 = vsel %vm188, %v93, 0
    %v319 = vsel %vm188, %v94, 0
    %v322 = vsel %vm188, %v95, 0
    %v325 = vsel %vm188, %v96, 0
    %v328 = vsel %vm188, %v97, 0
    %v331 = vsel %vm188, %v98, 0
    %v334 = vsel %vm188, %v99, 0
    %v337 = vsel %vm188, %v100, 0
    %v340 = vsel %vm188, %v101, 0
    %v343 = vsel %vm188, %v102, 0
    %v346 = vsel %vm188, %v103, 0
    %v349 = vsel %vm188, %v104, 0
    %v352 = vsel %vm188, %v105, 0
    %v355 = vsel %vm188, %v106, 0
    %v358 = vsel %vm188, %v107, 0
    %v361 = vsel %vm188, %v108, 0
    %v364 = vsel %vm188, %v109, 0
    %v367 = vsel %vm188, %v110, 0
    %v370 = vsel %vm188, %v111, 0
    %v373 = vsel %vm188, %v112, 0
    %v376 = vsel %vm188, %v113, 0
    %v379 = vsel %vm188, %v114, 0
    %v382 = vsel %vm188, %v115, 0
    %v385 = vsel %vm188, %v116, 0
    %v388 = vsel %vm188, %v117, 0
    %v391 = vsel %vm188, %v118, 0
    %v394 = vsel %vm188, %v119, 0
    %v397 = vsel %vm188, %v120, 0
    %v400 = vsel %vm188, %v121, 0
    %v403 = vsel %vm188, %v122, 0
    %v406 = vsel %vm188, %v123, 0
    %v409 = vsel %vm188, %v124, 0
    %v412 = vsel %vm188, %v125, 0
    %v415 = vsel %vm188, %v126, 0
    %v418 = vsel %vm188, %v127, 0
    %v421 = vsel %vm188, %v128, 0
    %v424 = vsel %vm188, %v129, 0
    %v427 = vsel %vm188, %v130, 0
    %v430 = vsel %vm188, %v131, 0
    %v433 = vsel %vm188, %v132, 0
    %v436 = vsel %vm188, %v133, 0
    %v439 = vsel %vm188, %v134, 0
    %v442 = vsel %vm188, %v135, 0
    %v445 = vsel %vm188, %v136, 0
    %v448 = vsel %vm188, %v137, 0
    %v451 = vsel %vm188, %v138, 0
    %v454 = vsel %vm188, %v139, 0
    %v457 = vsel %vm188, %v140, 0
    %v460 = vsel %vm188, %v141, 0
    %v463 = vsel %vm188, %v142, 0
    %v466 = vsel %vm188, %v143, 0
    %v469 = vsel %vm188, %v144, 0
    %v472 = vsel %vm188, %v145, 0
    %v475 = vsel %vm188, %v146, 0
    %v478 = vsel %vm188, %v147, 0
    %v481 = vsel %vm188, %v148, 0
    %v484 = vsel %vm188, %v149, 0
    %v487 = vsel %vm188, %v150, 0
    %v490 = vsel %vm188, %v151, 0
    %v493 = vsel %vm188, %v152, 0
    %v496 = vsel %vm188, %v153, 0
    %v499 = vsel %vm188, %v154, 0
    %v502 = vsel %vm188, %v155, 0
    %v505 = vsel %vm188, %v156, 0
    %v508 = vsel %vm188, %v157, 0
    %v511 = vsel %vm188, %v158, 0
    %v514 = vsel %vm188, %v159, 0
    %v517 = vsel %vm188, %v160, 0
    %v520 = vsel %vm188, %v161, 0
    %v523 = vsel %vm188, %v162, 0
    %v526 = vsel %vm188, %v163, 0
    %v529 = vsel %vm188, %v164, 0
    %v532 = vsel %vm188, %v165, 0
    %v535 = vsel %vm188, %v166, 0
    %v538 = vsel %vm188, %v167, 0
    %v541 = vsel %vm188, %v168, 0
    %v544 = vsel %vm188, %v169, 0
    %v547 = vsel %vm188, %v170, 0
    %v550 = vsel %vm188, %v171, 0
    %v553 = vsel %vm188, %v172, 0
    %v556 = vsel %vm188, %v173, 0
    %v559 = vsel %vm188, %v174, 0
    %v562 = vsel %vm188, %v175, 0
    %v565 = vsel %vm188, %v176, 0
    %v568 = vsel %vm188, %v177, 0
    %v571 = vsel %vm188, %v178, 0
    %573 = vmatprep.subr.mxu0 0.0
    %574 = vmatpush1.msra.mxu0 0.0
    %575 = vmatprep.subr.mxu0 0.0
    %576 = vmatpush1.msra.mxu0 0.0
    %577 = vmatprep.subr.mxu0 0.0
    %578 = vmatpush1.msra.mxu0 0.0
    %579 = vmatprep.subr.mxu0 0.0
    %580 = vmatpush1.msra.mxu0 0.0
    %581 = vmatprep.subr.mxu0 0.0
    %582 = vmatpush1.msra.mxu0 0.0
    %583 = vmatprep.subr.mxu0 0.0
    %584 = vmatpush1.msra.mxu0 0.0
    %585 = vmatprep.subr.mxu0 0.0
    %586 = vmatpush1.msra.mxu0 0.0
    %587 = vmatprep.subr.mxu0 0.0
    %588 = vmatpush1.msra.mxu0 0.0
    %589 = vmatprep.subr.mxu0 0.0
    %590 = vmatpush1.msra.mxu0 0.0
    %591 = vmatprep.subr.mxu0 0.0
    %592 = vmatpush1.msra.mxu0 0.0
    %593 = vmatprep.subr.mxu0 0.0
    %594 = vmatpush1.msra.mxu0 0.0
    %595 = vmatprep.subr.mxu0 0.0
    %596 = vmatpush1.msra.mxu0 0.0
    %597 = vmatprep.subr.mxu0 0.0
    %598 = vmatpush1.msra.mxu0 0.0
    %599 = vmatprep.subr.mxu0 0.0
    %600 = vmatpush1.msra.mxu0 0.0
    %601 = vmatprep.subr.mxu0 0.0
    %602 = vmatpush1.msra.mxu0 %v180
    %603 = vmatprep.subr.mxu0 0.0
    %604 = vmatpush1.msra.mxu0 %v179
    %605 = vmatprep.subr.mxu0 0.0
    %606 = vmatpush2.msra.mxu0 0.0
    %607 = vmatprep.subr.mxu0 0.0
    %608 = vmatpush2.msra.mxu0 0.0
    %609 = vmatprep.subr.mxu0 0.0
    %610 = vmatpush2.msra.mxu0 0.0
    %611 = vmatprep.subr.mxu0 0.0
    %612 = vmatpush2.msra.mxu0 0.0
    %613 = vmatprep.subr.mxu0 0.0
    %614 = vmatpush2.msra.mxu0 0.0
    %615 = vmatprep.subr.mxu0 0.0
    %616 = vmatpush2.msra.mxu0 0.0
    %617 = vmatprep.subr.mxu0 0.0
    %618 = vmatpush2.msra.mxu0 0.0
    %619 = vmatprep.subr.mxu0 0.0
    %620 = vmatpush2.msra.mxu0 0.0
    %621 = vmatprep.subr.mxu0 0.0
    %622 = vmatpush2.msra.mxu0 0.0
    %623 = vmatprep.subr.mxu0 0.0
    %624 = vmatpush2.msra.mxu0 0.0
    %625 = vmatprep.subr.mxu0 0.0
    %626 = vmatpush2.msra.mxu0 0.0
    %627 = vmatprep.subr.mxu0 0.0
    %628 = vmatpush2.msra.mxu0 0.0
    %629 = vmatprep.subr.mxu0 0.0
    %630 = vmatpush2.msra.mxu0 0.0
    %631 = vmatprep.subr.mxu0 0.0
    %632 = vmatpush2.msra.mxu0 0.0
    %633 = vmatprep.subr.mxu0 0.0
    %634 = vmatpush2.msra.mxu0 0.0
    %635 = vmatprep.subr.mxu0 0.0
    %636 = vmatpush2.msra.mxu0 0.0
    %637 = vmatprep.mubr.f32.mxu0 0.0
    %638 = vmatmul.mubr.f32.gmra.mxu0 %v190
    %v639 = vpop.f32.mrf.mxu0
    %v640 = vadd.f32 %v186, %v639
    %v641 = vpop.f32.mrf.mxu0
    %642 = vmatprep.mubr.f32.mxu0 0.0
    %643 = vmatmul.mubr.f32.gmra.mxu0 %v193
    %v644 = vpop.f32.mrf.mxu0
    %v645 = vadd.f32 %v186, %v644
    %v646 = vpop.f32.mrf.mxu0
    %647 = vmatprep.mubr.f32.mxu0 0.0
    %648 = vmatmul.mubr.f32.gmra.mxu0 %v196
    %v649 = vpop.f32.mrf.mxu0
    %v650 = vadd.f32 %v186, %v649
    %v651 = vpop.f32.mrf.mxu0
    %652 = vmatprep.mubr.f32.mxu0 0.0
    %653 = vmatmul.mubr.f32.gmra.mxu0 %v199
    %v654 = vpop.f32.mrf.mxu0
    %v655 = vadd.f32 %v186, %v654
    %v656 = vpop.f32.mrf.mxu0
    %657 = vmatprep.mubr.f32.mxu0 0.0
    %658 = vmatmul.mubr.f32.gmra.mxu0 %v202
    %v659 = vpop.f32.mrf.mxu0
    %v660 = vadd.f32 %v186, %v659
    %v661 = vpop.f32.mrf.mxu0
    %662 = vmatprep.mubr.f32.mxu0 0.0
    %663 = vmatmul.mubr.f32.gmra.mxu0 %v205
    %v664 = vpop.f32.mrf.mxu0
    %v665 = vadd.f32 %v186, %v664
    %v666 = vpop.f32.mrf.mxu0
    %667 = vmatprep.mubr.f32.mxu0 0.0
    %668 = vmatmul.mubr.f32.gmra.mxu0 %v208
    %v669 = vpop.f32.mrf.mxu0
    %v670 = vadd.f32 %v186, %v669
    %v671 = vpop.f32.mrf.mxu0
    %672 = vmatprep.mubr.f32.mxu0 0.0
    %673 = vmatmul.mubr.f32.gmra.mxu0 %v211
    %v674 = vpop.f32.mrf.mxu0
    %v675 = vadd.f32 %v186, %v674
    %v676 = vpop.f32.mrf.mxu0
    %677 = vmatprep.mubr.f32.mxu0 0.0
    %678 = vmatmul.mubr.f32.gmra.mxu0 %v214
    %v679 = vpop.f32.mrf.mxu0
    %v680 = vadd.f32 %v186, %v679
    %v681 = vpop.f32.mrf.mxu0
    %682 = vmatprep.mubr.f32.mxu0 0.0
    %683 = vmatmul.mubr.f32.gmra.mxu0 %v217
    %v684 = vpop.f32.mrf.mxu0
    %v685 = vadd.f32 %v186, %v684
    %v686 = vpop.f32.mrf.mxu0
    %687 = vmatprep.mubr.f32.mxu0 0.0
    %688 = vmatmul.mubr.f32.gmra.mxu0 %v220
    %v689 = vpop.f32.mrf.mxu0
    %v690 = vadd.f32 %v186, %v689
    %v691 = vpop.f32.mrf.mxu0
    %692 = vmatprep.mubr.f32.mxu0 0.0
    %693 = vmatmul.mubr.f32.gmra.mxu0 %v223
    %v694 = vpop.f32.mrf.mxu0
    %v695 = vadd.f32 %v186, %v694
    %v696 = vpop.f32.mrf.mxu0
    %697 = vmatprep.mubr.f32.mxu0 0.0
    %698 = vmatmul.mubr.f32.gmra.mxu0 %v226
    %v699 = vpop.f32.mrf.mxu0
    %v700 = vadd.f32 %v186, %v699
    %v701 = vpop.f32.mrf.mxu0
    %702 = vmatprep.mubr.f32.mxu0 0.0
    %703 = vmatmul.mubr.f32.gmra.mxu0 %v229
    %v704 = vpop.f32.mrf.mxu0
    %v705 = vadd.f32 %v186, %v704
    %v706 = vpop.f32.mrf.mxu0
    %707 = vmatprep.mubr.f32.mxu0 0.0
    %708 = vmatmul.mubr.f32.gmra.mxu0 %v232
    %v709 = vpop.f32.mrf.mxu0
    %v710 = vadd.f32 %v186, %v709
    %v711 = vpop.f32.mrf.mxu0
    %712 = vmatprep.mubr.f32.mxu0 0.0
    %713 = vmatmul.mubr.f32.gmra.mxu0 %v235
    %v714 = vpop.f32.mrf.mxu0
    %v715 = vadd.f32 %v186, %v714
    %v716 = vpop.f32.mrf.mxu0
    %717 = vmatprep.mubr.f32.mxu0 0.0
    %718 = vmatmul.mubr.f32.gmra.mxu0 %v238
    %v719 = vpop.f32.mrf.mxu0
    %v720 = vadd.f32 %v186, %v719
    %v721 = vpop.f32.mrf.mxu0
    %722 = vmatprep.mubr.f32.mxu0 0.0
    %723 = vmatmul.mubr.f32.gmra.mxu0 %v241
    %v724 = vpop.f32.mrf.mxu0
    %v725 = vadd.f32 %v186, %v724
    %v726 = vpop.f32.mrf.mxu0
    %727 = vmatprep.mubr.f32.mxu0 0.0
    %728 = vmatmul.mubr.f32.gmra.mxu0 %v244
    %v729 = vpop.f32.mrf.mxu0
    %v730 = vadd.f32 %v186, %v729
    %v731 = vpop.f32.mrf.mxu0
    %732 = vmatprep.mubr.f32.mxu0 0.0
    %733 = vmatmul.mubr.f32.gmra.mxu0 %v247
    %v734 = vpop.f32.mrf.mxu0
    %v735 = vadd.f32 %v186, %v734
    %v736 = vpop.f32.mrf.mxu0
    %737 = vmatprep.mubr.f32.mxu0 0.0
    %738 = vmatmul.mubr.f32.gmra.mxu0 %v250
    %v739 = vpop.f32.mrf.mxu0
    %v740 = vadd.f32 %v186, %v739
    %v741 = vpop.f32.mrf.mxu0
    %742 = vmatprep.mubr.f32.mxu0 0.0
    %743 = vmatmul.mubr.f32.gmra.mxu0 %v253
    %v744 = vpop.f32.mrf.mxu0
    %v745 = vadd.f32 %v186, %v744
    %v746 = vpop.f32.mrf.mxu0
    %747 = vmatprep.mubr.f32.mxu0 0.0
    %748 = vmatmul.mubr.f32.gmra.mxu0 %v256
    %v749 = vpop.f32.mrf.mxu0
    %v750 = vadd.f32 %v186, %v749
    %v751 = vpop.f32.mrf.mxu0
    %752 = vmatprep.mubr.f32.mxu0 0.0
    %753 = vmatmul.mubr.f32.gmra.mxu0 %v259
    %v754 = vpop.f32.mrf.mxu0
    %v755 = vadd.f32 %v186, %v754
    %v756 = vpop.f32.mrf.mxu0
    %757 = vmatprep.mubr.f32.mxu0 0.0
    %758 = vmatmul.mubr.f32.gmra.mxu0 %v262
    %v759 = vpop.f32.mrf.mxu0
    %v760 = vadd.f32 %v186, %v759
    %v761 = vpop.f32.mrf.mxu0
    %762 = vmatprep.mubr.f32.mxu0 0.0
    %763 = vmatmul.mubr.f32.gmra.mxu0 %v265
    %v764 = vpop.f32.mrf.mxu0
    %v765 = vadd.f32 %v186, %v764
    %v766 = vpop.f32.mrf.mxu0
    %767 = vmatprep.mubr.f32.mxu0 0.0
    %768 = vmatmul.mubr.f32.gmra.mxu0 %v268
    %v769 = vpop.f32.mrf.mxu0
    %v770 = vadd.f32 %v186, %v769
    %v771 = vpop.f32.mrf.mxu0
    %772 = vmatprep.mubr.f32.mxu0 0.0
    %773 = vmatmul.mubr.f32.gmra.mxu0 %v271
    %v774 = vpop.f32.mrf.mxu0
    %v775 = vadd.f32 %v186, %v774
    %v776 = vpop.f32.mrf.mxu0
    %777 = vmatprep.mubr.f32.mxu0 0.0
    %778 = vmatmul.mubr.f32.gmra.mxu0 %v274
    %v779 = vpop.f32.mrf.mxu0
    %v780 = vadd.f32 %v186, %v779
    %v781 = vpop.f32.mrf.mxu0
    %782 = vmatprep.mubr.f32.mxu0 0.0
    %783 = vmatmul.mubr.f32.gmra.mxu0 %v277
    %v784 = vpop.f32.mrf.mxu0
    %v785 = vadd.f32 %v186, %v784
    %v786 = vpop.f32.mrf.mxu0
    %787 = vmatprep.mubr.f32.mxu0 0.0
    %788 = vmatmul.mubr.f32.gmra.mxu0 %v280
    %v789 = vpop.f32.mrf.mxu0
    %v790 = vadd.f32 %v186, %v789
    %v791 = vpop.f32.mrf.mxu0
    %792 = vmatprep.mubr.f32.mxu0 0.0
    %793 = vmatmul.mubr.f32.gmra.mxu0 %v283
    %v794 = vpop.f32.mrf.mxu0
    %v795 = vadd.f32 %v186, %v794
    %v796 = vpop.f32.mrf.mxu0
    %797 = vmatprep.mubr.f32.mxu0 0.0
    %798 = vmatmul.mubr.f32.gmra.mxu0 %v286
    %v799 = vpop.f32.mrf.mxu0
    %v800 = vadd.f32 %v186, %v799
    %v801 = vpop.f32.mrf.mxu0
    %802 = vmatprep.mubr.f32.mxu0 0.0
    %803 = vmatmul.mubr.f32.gmra.mxu0 %v289
    %v804 = vpop.f32.mrf.mxu0
    %v805 = vadd.f32 %v186, %v804
    %v806 = vpop.f32.mrf.mxu0
    %807 = vmatprep.mubr.f32.mxu0 0.0
    %808 = vmatmul.mubr.f32.gmra.mxu0 %v292
    %v809 = vpop.f32.mrf.mxu0
    %v810 = vadd.f32 %v186, %v809
    %v811 = vpop.f32.mrf.mxu0
    %812 = vmatprep.mubr.f32.mxu0 0.0
    %813 = vmatmul.mubr.f32.gmra.mxu0 %v295
    %v814 = vpop.f32.mrf.mxu0
    %v815 = vadd.f32 %v186, %v814
    %v816 = vpop.f32.mrf.mxu0
    %817 = vmatprep.mubr.f32.mxu0 0.0
    %818 = vmatmul.mubr.f32.gmra.mxu0 %v298
    %v819 = vpop.f32.mrf.mxu0
    %v820 = vadd.f32 %v186, %v819
    %v821 = vpop.f32.mrf.mxu0
    %822 = vmatprep.mubr.f32.mxu0 0.0
    %823 = vmatmul.mubr.f32.gmra.mxu0 %v301
    %v824 = vpop.f32.mrf.mxu0
    %v825 = vadd.f32 %v186, %v824
    %v826 = vpop.f32.mrf.mxu0
    %827 = vmatprep.mubr.f32.mxu0 0.0
    %828 = vmatmul.mubr.f32.gmra.mxu0 %v304
    %v829 = vpop.f32.mrf.mxu0
    %v830 = vadd.f32 %v186, %v829
    %v831 = vpop.f32.mrf.mxu0
    %832 = vmatprep.mubr.f32.mxu0 0.0
    %833 = vmatmul.mubr.f32.gmra.mxu0 %v307
    %v834 = vpop.f32.mrf.mxu0
    %v835 = vadd.f32 %v186, %v834
    %v836 = vpop.f32.mrf.mxu0
    %837 = vmatprep.mubr.f32.mxu0 0.0
    %838 = vmatmul.mubr.f32.gmra.mxu0 %v310
    %v839 = vpop.f32.mrf.mxu0
    %v840 = vadd.f32 %v186, %v839
    %v841 = vpop.f32.mrf.mxu0
    %842 = vmatprep.mubr.f32.mxu0 0.0
    %843 = vmatmul.mubr.f32.gmra.mxu0 %v313
    %v844 = vpop.f32.mrf.mxu0
    %v845 = vadd.f32 %v186, %v844
    %v846 = vpop.f32.mrf.mxu0
    %847 = vmatprep.mubr.f32.mxu0 0.0
    %848 = vmatmul.mubr.f32.gmra.mxu0 %v316
    %v849 = vpop.f32.mrf.mxu0
    %v850 = vadd.f32 %v186, %v849
    %v851 = vpop.f32.mrf.mxu0
    %852 = vmatprep.mubr.f32.mxu0 0.0
    %853 = vmatmul.mubr.f32.gmra.mxu0 %v319
    %v854 = vpop.f32.mrf.mxu0
    %v855 = vadd.f32 %v186, %v854
    %v856 = vpop.f32.mrf.mxu0
    %857 = vmatprep.mubr.f32.mxu0 0.0
    %858 = vmatmul.mubr.f32.gmra.mxu0 %v322
    %v859 = vpop.f32.mrf.mxu0
    %v860 = vadd.f32 %v186, %v859
    %v861 = vpop.f32.mrf.mxu0
    %862 = vmatprep.mubr.f32.mxu0 0.0
    %863 = vmatmul.mubr.f32.gmra.mxu0 %v325
    %v864 = vpop.f32.mrf.mxu0
    %v865 = vadd.f32 %v186, %v864
    %v866 = vpop.f32.mrf.mxu0
    %867 = vmatprep.mubr.f32.mxu0 0.0
    %868 = vmatmul.mubr.f32.gmra.mxu0 %v328
    %v869 = vpop.f32.mrf.mxu0
    %v870 = vadd.f32 %v186, %v869
    %v871 = vpop.f32.mrf.mxu0
    %872 = vmatprep.mubr.f32.mxu0 0.0
    %873 = vmatmul.mubr.f32.gmra.mxu0 %v331
    %v874 = vpop.f32.mrf.mxu0
    %v875 = vadd.f32 %v186, %v874
    %v876 = vpop.f32.mrf.mxu0
    %877 = vmatprep.mubr.f32.mxu0 0.0
    %878 = vmatmul.mubr.f32.gmra.mxu0 %v334
    %v879 = vpop.f32.mrf.mxu0
    %v880 = vadd.f32 %v186, %v879
    %v881 = vpop.f32.mrf.mxu0
    %882 = vmatprep.mubr.f32.mxu0 0.0
    %883 = vmatmul.mubr.f32.gmra.mxu0 %v337
    %v884 = vpop.f32.mrf.mxu0
    %v885 = vadd.f32 %v186, %v884
    %v886 = vpop.f32.mrf.mxu0
    %887 = vmatprep.mubr.f32.mxu0 0.0
    %888 = vmatmul.mubr.f32.gmra.mxu0 %v340
    %v889 = vpop.f32.mrf.mxu0
    %v890 = vadd.f32 %v186, %v889
    %v891 = vpop.f32.mrf.mxu0
    %892 = vmatprep.mubr.f32.mxu0 0.0
    %893 = vmatmul.mubr.f32.gmra.mxu0 %v343
    %v894 = vpop.f32.mrf.mxu0
    %v895 = vadd.f32 %v186, %v894
    %v896 = vpop.f32.mrf.mxu0
    %897 = vmatprep.mubr.f32.mxu0 0.0
    %898 = vmatmul.mubr.f32.gmra.mxu0 %v346
    %v899 = vpop.f32.mrf.mxu0
    %v900 = vadd.f32 %v186, %v899
    %v901 = vpop.f32.mrf.mxu0
    %902 = vmatprep.mubr.f32.mxu0 0.0
    %903 = vmatmul.mubr.f32.gmra.mxu0 %v349
    %v904 = vpop.f32.mrf.mxu0
    %v905 = vadd.f32 %v186, %v904
    %v906 = vpop.f32.mrf.mxu0
    %907 = vmatprep.mubr.f32.mxu0 0.0
    %908 = vmatmul.mubr.f32.gmra.mxu0 %v352
    %v909 = vpop.f32.mrf.mxu0
    %v910 = vadd.f32 %v186, %v909
    %v911 = vpop.f32.mrf.mxu0
    %912 = vmatprep.mubr.f32.mxu0 0.0
    %913 = vmatmul.mubr.f32.gmra.mxu0 %v355
    %v914 = vpop.f32.mrf.mxu0
    %v915 = vadd.f32 %v186, %v914
    %v916 = vpop.f32.mrf.mxu0
    %917 = vmatprep.mubr.f32.mxu0 0.0
    %918 = vmatmul.mubr.f32.gmra.mxu0 %v358
    %v919 = vpop.f32.mrf.mxu0
    %v920 = vadd.f32 %v186, %v919
    %v921 = vpop.f32.mrf.mxu0
    %922 = vmatprep.mubr.f32.mxu0 0.0
    %923 = vmatmul.mubr.f32.gmra.mxu0 %v361
    %v924 = vpop.f32.mrf.mxu0
    %v925 = vadd.f32 %v186, %v924
    %v926 = vpop.f32.mrf.mxu0
    %927 = vmatprep.mubr.f32.mxu0 0.0
    %928 = vmatmul.mubr.f32.gmra.mxu0 %v364
    %v929 = vpop.f32.mrf.mxu0
    %v930 = vadd.f32 %v186, %v929
    %v931 = vpop.f32.mrf.mxu0
    %932 = vmatprep.mubr.f32.mxu0 0.0
    %933 = vmatmul.mubr.f32.gmra.mxu0 %v367
    %v934 = vpop.f32.mrf.mxu0
    %v935 = vadd.f32 %v186, %v934
    %v936 = vpop.f32.mrf.mxu0
    %937 = vmatprep.mubr.f32.mxu0 0.0
    %938 = vmatmul.mubr.f32.gmra.mxu0 %v370
    %v939 = vpop.f32.mrf.mxu0
    %v940 = vadd.f32 %v186, %v939
    %v941 = vpop.f32.mrf.mxu0
    %942 = vmatprep.mubr.f32.mxu0 0.0
    %943 = vmatmul.mubr.f32.gmra.mxu0 %v373
    %v944 = vpop.f32.mrf.mxu0
    %v945 = vadd.f32 %v186, %v944
    %v946 = vpop.f32.mrf.mxu0
    %947 = vmatprep.mubr.f32.mxu0 0.0
    %948 = vmatmul.mubr.f32.gmra.mxu0 %v376
    %v949 = vpop.f32.mrf.mxu0
    %v950 = vadd.f32 %v186, %v949
    %v951 = vpop.f32.mrf.mxu0
    %952 = vmatprep.mubr.f32.mxu0 0.0
    %953 = vmatmul.mubr.f32.gmra.mxu0 %v379
    %v954 = vpop.f32.mrf.mxu0
    %v955 = vadd.f32 %v186, %v954
    %v956 = vpop.f32.mrf.mxu0
    %957 = vmatprep.mubr.f32.mxu0 0.0
    %958 = vmatmul.mubr.f32.gmra.mxu0 %v382
    %v959 = vpop.f32.mrf.mxu0
    %v960 = vadd.f32 %v186, %v959
    %v961 = vpop.f32.mrf.mxu0
    %962 = vmatprep.mubr.f32.mxu0 0.0
    %963 = vmatmul.mubr.f32.gmra.mxu0 %v385
    %v964 = vpop.f32.mrf.mxu0
    %v965 = vadd.f32 %v186, %v964
    %v966 = vpop.f32.mrf.mxu0
    %967 = vmatprep.mubr.f32.mxu0 0.0
    %968 = vmatmul.mubr.f32.gmra.mxu0 %v388
    %v969 = vpop.f32.mrf.mxu0
    %v970 = vadd.f32 %v186, %v969
    %v971 = vpop.f32.mrf.mxu0
    %972 = vmatprep.mubr.f32.mxu0 0.0
    %973 = vmatmul.mubr.f32.gmra.mxu0 %v391
    %v974 = vpop.f32.mrf.mxu0
    %v975 = vadd.f32 %v186, %v974
    %v976 = vpop.f32.mrf.mxu0
    %977 = vmatprep.mubr.f32.mxu0 0.0
    %978 = vmatmul.mubr.f32.gmra.mxu0 %v394
    %v979 = vpop.f32.mrf.mxu0
    %v980 = vadd.f32 %v186, %v979
    %v981 = vpop.f32.mrf.mxu0
    %982 = vmatprep.mubr.f32.mxu0 0.0
    %983 = vmatmul.mubr.f32.gmra.mxu0 %v397
    %v984 = vpop.f32.mrf.mxu0
    %v985 = vadd.f32 %v186, %v984
    %v986 = vpop.f32.mrf.mxu0
    %987 = vmatprep.mubr.f32.mxu0 0.0
    %988 = vmatmul.mubr.f32.gmra.mxu0 %v400
    %v989 = vpop.f32.mrf.mxu0
    %v990 = vadd.f32 %v186, %v989
    %v991 = vpop.f32.mrf.mxu0
    %992 = vmatprep.mubr.f32.mxu0 0.0
    %993 = vmatmul.mubr.f32.gmra.mxu0 %v403
    %v994 = vpop.f32.mrf.mxu0
    %v995 = vadd.f32 %v186, %v994
    %v996 = vpop.f32.mrf.mxu0
    %997 = vmatprep.mubr.f32.mxu0 0.0
    %998 = vmatmul.mubr.f32.gmra.mxu0 %v406
    %v999 = vpop.f32.mrf.mxu0
    %v1000 = vadd.f32 %v186, %v999
    %v1001 = vpop.f32.mrf.mxu0
    %1002 = vmatprep.mubr.f32.mxu0 0.0
    %1003 = vmatmul.mubr.f32.gmra.mxu0 %v409
    %v1004 = vpop.f32.mrf.mxu0
    %v1005 = vadd.f32 %v186, %v1004
    %v1006 = vpop.f32.mrf.mxu0
    %1007 = vmatprep.mubr.f32.mxu0 0.0
    %1008 = vmatmul.mubr.f32.gmra.mxu0 %v412
    %v1009 = vpop.f32.mrf.mxu0
    %v1010 = vadd.f32 %v186, %v1009
    %v1011 = vpop.f32.mrf.mxu0
    %1012 = vmatprep.mubr.f32.mxu0 0.0
    %1013 = vmatmul.mubr.f32.gmra.mxu0 %v415
    %v1014 = vpop.f32.mrf.mxu0
    %v1015 = vadd.f32 %v186, %v1014
    %v1016 = vpop.f32.mrf.mxu0
    %1017 = vmatprep.mubr.f32.mxu0 0.0
    %1018 = vmatmul.mubr.f32.gmra.mxu0 %v418
    %v1019 = vpop.f32.mrf.mxu0
    %v1020 = vadd.f32 %v186, %v1019
    %v1021 = vpop.f32.mrf.mxu0
    %1022 = vmatprep.mubr.f32.mxu0 0.0
    %1023 = vmatmul.mubr.f32.gmra.mxu0 %v421
    %v1024 = vpop.f32.mrf.mxu0
    %v1025 = vadd.f32 %v186, %v1024
    %v1026 = vpop.f32.mrf.mxu0
    %1027 = vmatprep.mubr.f32.mxu0 0.0
    %1028 = vmatmul.mubr.f32.gmra.mxu0 %v424
    %v1029 = vpop.f32.mrf.mxu0
    %v1030 = vadd.f32 %v186, %v1029
    %v1031 = vpop.f32.mrf.mxu0
    %1032 = vmatprep.mubr.f32.mxu0 0.0
    %1033 = vmatmul.mubr.f32.gmra.mxu0 %v427
    %v1034 = vpop.f32.mrf.mxu0
    %v1035 = vadd.f32 %v186, %v1034
    %v1036 = vpop.f32.mrf.mxu0
    %1037 = vmatprep.mubr.f32.mxu0 0.0
    %1038 = vmatmul.mubr.f32.gmra.mxu0 %v430
    %v1039 = vpop.f32.mrf.mxu0
    %v1040 = vadd.f32 %v186, %v1039
    %v1041 = vpop.f32.mrf.mxu0
    %1042 = vmatprep.mubr.f32.mxu0 0.0
    %1043 = vmatmul.mubr.f32.gmra.mxu0 %v433
    %v1044 = vpop.f32.mrf.mxu0
    %v1045 = vadd.f32 %v186, %v1044
    %v1046 = vpop.f32.mrf.mxu0
    %1047 = vmatprep.mubr.f32.mxu0 0.0
    %1048 = vmatmul.mubr.f32.gmra.mxu0 %v436
    %v1049 = vpop.f32.mrf.mxu0
    %v1050 = vadd.f32 %v186, %v1049
    %v1051 = vpop.f32.mrf.mxu0
    %1052 = vmatprep.mubr.f32.mxu0 0.0
    %1053 = vmatmul.mubr.f32.gmra.mxu0 %v439
    %v1054 = vpop.f32.mrf.mxu0
    %v1055 = vadd.f32 %v186, %v1054
    %v1056 = vpop.f32.mrf.mxu0
    %1057 = vmatprep.mubr.f32.mxu0 0.0
    %1058 = vmatmul.mubr.f32.gmra.mxu0 %v442
    %v1059 = vpop.f32.mrf.mxu0
    %v1060 = vadd.f32 %v186, %v1059
    %v1061 = vpop.f32.mrf.mxu0
    %1062 = vmatprep.mubr.f32.mxu0 0.0
    %1063 = vmatmul.mubr.f32.gmra.mxu0 %v445
    %v1064 = vpop.f32.mrf.mxu0
    %v1065 = vadd.f32 %v186, %v1064
    %v1066 = vpop.f32.mrf.mxu0
    %1067 = vmatprep.mubr.f32.mxu0 0.0
    %1068 = vmatmul.mubr.f32.gmra.mxu0 %v448
    %v1069 = vpop.f32.mrf.mxu0
    %v1070 = vadd.f32 %v186, %v1069
    %v1071 = vpop.f32.mrf.mxu0
    %1072 = vmatprep.mubr.f32.mxu0 0.0
    %1073 = vmatmul.mubr.f32.gmra.mxu0 %v451
    %v1074 = vpop.f32.mrf.mxu0
    %v1075 = vadd.f32 %v186, %v1074
    %v1076 = vpop.f32.mrf.mxu0
    %1077 = vmatprep.mubr.f32.mxu0 0.0
    %1078 = vmatmul.mubr.f32.gmra.mxu0 %v454
    %v1079 = vpop.f32.mrf.mxu0
    %v1080 = vadd.f32 %v186, %v1079
    %v1081 = vpop.f32.mrf.mxu0
    %1082 = vmatprep.mubr.f32.mxu0 0.0
    %1083 = vmatmul.mubr.f32.gmra.mxu0 %v457
    %v1084 = vpop.f32.mrf.mxu0
    %v1085 = vadd.f32 %v186, %v1084
    %v1086 = vpop.f32.mrf.mxu0
    %1087 = vmatprep.mubr.f32.mxu0 0.0
    %1088 = vmatmul.mubr.f32.gmra.mxu0 %v460
    %v1089 = vpop.f32.mrf.mxu0
    %v1090 = vadd.f32 %v186, %v1089
    %v1091 = vpop.f32.mrf.mxu0
    %1092 = vmatprep.mubr.f32.mxu0 0.0
    %1093 = vmatmul.mubr.f32.gmra.mxu0 %v463
    %v1094 = vpop.f32.mrf.mxu0
    %v1095 = vadd.f32 %v186, %v1094
    %v1096 = vpop.f32.mrf.mxu0
    %1097 = vmatprep.mubr.f32.mxu0 0.0
    %1098 = vmatmul.mubr.f32.gmra.mxu0 %v466
    %v1099 = vpop.f32.mrf.mxu0
    %v1100 = vadd.f32 %v186, %v1099
    %v1101 = vpop.f32.mrf.mxu0
    %1102 = vmatprep.mubr.f32.mxu0 0.0
    %1103 = vmatmul.mubr.f32.gmra.mxu0 %v469
    %v1104 = vpop.f32.mrf.mxu0
    %v1105 = vadd.f32 %v186, %v1104
    %v1106 = vpop.f32.mrf.mxu0
    %1107 = vmatprep.mubr.f32.mxu0 0.0
    %1108 = vmatmul.mubr.f32.gmra.mxu0 %v472
    %v1109 = vpop.f32.mrf.mxu0
    %v1110 = vadd.f32 %v186, %v1109
    %v1111 = vpop.f32.mrf.mxu0
    %1112 = vmatprep.mubr.f32.mxu0 0.0
    %1113 = vmatmul.mubr.f32.gmra.mxu0 %v475
    %v1114 = vpop.f32.mrf.mxu0
    %v1115 = vadd.f32 %v186, %v1114
    %v1116 = vpop.f32.mrf.mxu0
    %1117 = vmatprep.mubr.f32.mxu0 0.0
    %1118 = vmatmul.mubr.f32.gmra.mxu0 %v478
    %v1119 = vpop.f32.mrf.mxu0
    %v1120 = vadd.f32 %v186, %v1119
    %v1121 = vpop.f32.mrf.mxu0
    %1122 = vmatprep.mubr.f32.mxu0 0.0
    %1123 = vmatmul.mubr.f32.gmra.mxu0 %v481
    %v1124 = vpop.f32.mrf.mxu0
    %v1125 = vadd.f32 %v186, %v1124
    %v1126 = vpop.f32.mrf.mxu0
    %1127 = vmatprep.mubr.f32.mxu0 0.0
    %1128 = vmatmul.mubr.f32.gmra.mxu0 %v484
    %v1129 = vpop.f32.mrf.mxu0
    %v1130 = vadd.f32 %v186, %v1129
    %v1131 = vpop.f32.mrf.mxu0
    %1132 = vmatprep.mubr.f32.mxu0 0.0
    %1133 = vmatmul.mubr.f32.gmra.mxu0 %v487
    %v1134 = vpop.f32.mrf.mxu0
    %v1135 = vadd.f32 %v186, %v1134
    %v1136 = vpop.f32.mrf.mxu0
    %1137 = vmatprep.mubr.f32.mxu0 0.0
    %1138 = vmatmul.mubr.f32.gmra.mxu0 %v490
    %v1139 = vpop.f32.mrf.mxu0
    %v1140 = vadd.f32 %v186, %v1139
    %v1141 = vpop.f32.mrf.mxu0
    %1142 = vmatprep.mubr.f32.mxu0 0.0
    %1143 = vmatmul.mubr.f32.gmra.mxu0 %v493
    %v1144 = vpop.f32.mrf.mxu0
    %v1145 = vadd.f32 %v186, %v1144
    %v1146 = vpop.f32.mrf.mxu0
    %1147 = vmatprep.mubr.f32.mxu0 0.0
    %1148 = vmatmul.mubr.f32.gmra.mxu0 %v496
    %v1149 = vpop.f32.mrf.mxu0
    %v1150 = vadd.f32 %v186, %v1149
    %v1151 = vpop.f32.mrf.mxu0
    %1152 = vmatprep.mubr.f32.mxu0 0.0
    %1153 = vmatmul.mubr.f32.gmra.mxu0 %v499
    %v1154 = vpop.f32.mrf.mxu0
    %v1155 = vadd.f32 %v186, %v1154
    %v1156 = vpop.f32.mrf.mxu0
    %1157 = vmatprep.mubr.f32.mxu0 0.0
    %1158 = vmatmul.mubr.f32.gmra.mxu0 %v502
    %v1159 = vpop.f32.mrf.mxu0
    %v1160 = vadd.f32 %v186, %v1159
    %v1161 = vpop.f32.mrf.mxu0
    %1162 = vmatprep.mubr.f32.mxu0 0.0
    %1163 = vmatmul.mubr.f32.gmra.mxu0 %v505
    %v1164 = vpop.f32.mrf.mxu0
    %v1165 = vadd.f32 %v186, %v1164
    %v1166 = vpop.f32.mrf.mxu0
    %1167 = vmatprep.mubr.f32.mxu0 0.0
    %1168 = vmatmul.mubr.f32.gmra.mxu0 %v508
    %v1169 = vpop.f32.mrf.mxu0
    %v1170 = vadd.f32 %v186, %v1169
    %v1171 = vpop.f32.mrf.mxu0
    %1172 = vmatprep.mubr.f32.mxu0 0.0
    %1173 = vmatmul.mubr.f32.gmra.mxu0 %v511
    %v1174 = vpop.f32.mrf.mxu0
    %v1175 = vadd.f32 %v186, %v1174
    %v1176 = vpop.f32.mrf.mxu0
    %1177 = vmatprep.mubr.f32.mxu0 0.0
    %1178 = vmatmul.mubr.f32.gmra.mxu0 %v514
    %v1179 = vpop.f32.mrf.mxu0
    %v1180 = vadd.f32 %v186, %v1179
    %v1181 = vpop.f32.mrf.mxu0
    %1182 = vmatprep.mubr.f32.mxu0 0.0
    %1183 = vmatmul.mubr.f32.gmra.mxu0 %v517
    %v1184 = vpop.f32.mrf.mxu0
    %v1185 = vadd.f32 %v186, %v1184
    %v1186 = vpop.f32.mrf.mxu0
    %1187 = vmatprep.mubr.f32.mxu0 0.0
    %1188 = vmatmul.mubr.f32.gmra.mxu0 %v520
    %v1189 = vpop.f32.mrf.mxu0
    %v1190 = vadd.f32 %v186, %v1189
    %v1191 = vpop.f32.mrf.mxu0
    %1192 = vmatprep.mubr.f32.mxu0 0.0
    %1193 = vmatmul.mubr.f32.gmra.mxu0 %v523
    %v1194 = vpop.f32.mrf.mxu0
    %v1195 = vadd.f32 %v186, %v1194
    %v1196 = vpop.f32.mrf.mxu0
    %1197 = vmatprep.mubr.f32.mxu0 0.0
    %1198 = vmatmul.mubr.f32.gmra.mxu0 %v526
    %v1199 = vpop.f32.mrf.mxu0
    %v1200 = vadd.f32 %v186, %v1199
    %v1201 = vpop.f32.mrf.mxu0
    %1202 = vmatprep.mubr.f32.mxu0 0.0
    %1203 = vmatmul.mubr.f32.gmra.mxu0 %v529
    %v1204 = vpop.f32.mrf.mxu0
    %v1205 = vadd.f32 %v186, %v1204
    %v1206 = vpop.f32.mrf.mxu0
    %1207 = vmatprep.mubr.f32.mxu0 0.0
    %1208 = vmatmul.mubr.f32.gmra.mxu0 %v532
    %v1209 = vpop.f32.mrf.mxu0
    %v1210 = vadd.f32 %v186, %v1209
    %v1211 = vpop.f32.mrf.mxu0
    %1212 = vmatprep.mubr.f32.mxu0 0.0
    %1213 = vmatmul.mubr.f32.gmra.mxu0 %v535
    %v1214 = vpop.f32.mrf.mxu0
    %v1215 = vadd.f32 %v186, %v1214
    %v1216 = vpop.f32.mrf.mxu0
    %1217 = vmatprep.mubr.f32.mxu0 0.0
    %1218 = vmatmul.mubr.f32.gmra.mxu0 %v538
    %v1219 = vpop.f32.mrf.mxu0
    %v1220 = vadd.f32 %v186, %v1219
    %v1221 = vpop.f32.mrf.mxu0
    %1222 = vmatprep.mubr.f32.mxu0 0.0
    %1223 = vmatmul.mubr.f32.gmra.mxu0 %v541
    %v1224 = vpop.f32.mrf.mxu0
    %v1225 = vadd.f32 %v186, %v1224
    %v1226 = vpop.f32.mrf.mxu0
    %1227 = vmatprep.mubr.f32.mxu0 0.0
    %1228 = vmatmul.mubr.f32.gmra.mxu0 %v544
    %v1229 = vpop.f32.mrf.mxu0
    %v1230 = vadd.f32 %v186, %v1229
    %v1231 = vpop.f32.mrf.mxu0
    %1232 = vmatprep.mubr.f32.mxu0 0.0
    %1233 = vmatmul.mubr.f32.gmra.mxu0 %v547
    %v1234 = vpop.f32.mrf.mxu0
    %v1235 = vadd.f32 %v186, %v1234
    %v1236 = vpop.f32.mrf.mxu0
    %1237 = vmatprep.mubr.f32.mxu0 0.0
    %1238 = vmatmul.mubr.f32.gmra.mxu0 %v550
    %v1239 = vpop.f32.mrf.mxu0
    %v1240 = vadd.f32 %v186, %v1239
    %v1241 = vpop.f32.mrf.mxu0
    %1242 = vmatprep.mubr.f32.mxu0 0.0
    %1243 = vmatmul.mubr.f32.gmra.mxu0 %v553
    %v1244 = vpop.f32.mrf.mxu0
    %v1245 = vadd.f32 %v186, %v1244
    %v1246 = vpop.f32.mrf.mxu0
    %1247 = vmatprep.mubr.f32.mxu0 0.0
    %1248 = vmatmul.mubr.f32.gmra.mxu0 %v556
    %v1249 = vpop.f32.mrf.mxu0
    %v1250 = vadd.f32 %v186, %v1249
    %v1251 = vpop.f32.mrf.mxu0
    %1252 = vmatprep.mubr.f32.mxu0 0.0
    %1253 = vmatmul.mubr.f32.gmra.mxu0 %v559
    %v1254 = vpop.f32.mrf.mxu0
    %v1255 = vadd.f32 %v186, %v1254
    %v1256 = vpop.f32.mrf.mxu0
    %1257 = vmatprep.mubr.f32.mxu0 0.0
    %1258 = vmatmul.mubr.f32.gmra.mxu0 %v562
    %v1259 = vpop.f32.mrf.mxu0
    %v1260 = vadd.f32 %v186, %v1259
    %v1261 = vpop.f32.mrf.mxu0
    %1262 = vmatprep.mubr.f32.mxu0 0.0
    %1263 = vmatmul.mubr.f32.gmra.mxu0 %v565
    %v1264 = vpop.f32.mrf.mxu0
    %v1265 = vadd.f32 %v186, %v1264
    %v1266 = vpop.f32.mrf.mxu0
    %1267 = vmatprep.mubr.f32.mxu0 0.0
    %1268 = vmatmul.mubr.f32.gmra.mxu0 %v568
    %v1269 = vpop.f32.mrf.mxu0
    %v1270 = vadd.f32 %v186, %v1269
    %v1271 = vpop.f32.mrf.mxu0
    %1272 = vmatprep.mubr.f32.mxu0 0.0
    %1273 = vmatmul.mubr.f32.gmra.mxu0 %v571
    %v1274 = vpop.f32.mrf.mxu0
    %v1275 = vadd.f32 %v186, %v1274
    %v1276 = vpop.f32.mrf.mxu0
    %1277 = vdwg.mxu0
    %v1278 = vmax.f32 %v640, 0.0
    %v1279 = vmax.f32 %v645, 0.0
    %v1280 = vmax.f32 %v650, 0.0
    %v1281 = vmax.f32 %v655, 0.0
    %v1282 = vmax.f32 %v660, 0.0
    %v1283 = vmax.f32 %v665, 0.0
    %v1284 = vmax.f32 %v670, 0.0
    %v1285 = vmax.f32 %v675, 0.0
    %v1286 = vmax.f32 %v680, 0.0
    %v1287 = vmax.f32 %v685, 0.0
    %v1288 = vmax.f32 %v690, 0.0
    %v1289 = vmax.f32 %v695, 0.0
    %v1290 = vmax.f32 %v700, 0.0
    %v1291 = vmax.f32 %v705, 0.0
    %v1292 = vmax.f32 %v710, 0.0
    %v1293 = vmax.f32 %v715, 0.0
    %v1294 = vmax.f32 %v720, 0.0
    %v1295 = vmax.f32 %v725, 0.0
    %v1296 = vmax.f32 %v730, 0.0
    %v1297 = vmax.f32 %v735, 0.0
    %v1298 = vmax.f32 %v740, 0.0
    %v1299 = vmax.f32 %v745, 0.0
    %v1300 = vmax.f32 %v750, 0.0
    %v1301 = vmax.f32 %v755, 0.0
    %v1302 = vmax.f32 %v760, 0.0
    %v1303 = vmax.f32 %v765, 0.0
    %v1304 = vmax.f32 %v770, 0.0
    %v1305 = vmax.f32 %v775, 0.0
    %v1306 = vmax.f32 %v780, 0.0
    %v1307 = vmax.f32 %v785, 0.0
    %v1308 = vmax.f32 %v790, 0.0
    %v1309 = vmax.f32 %v795, 0.0
    %v1310 = vmax.f32 %v800, 0.0
    %v1311 = vmax.f32 %v805, 0.0
    %v1312 = vmax.f32 %v810, 0.0
    %v1313 = vmax.f32 %v815, 0.0
    %v1314 = vmax.f32 %v820, 0.0
    %v1315 = vmax.f32 %v825, 0.0
    %v1316 = vmax.f32 %v830, 0.0
    %v1317 = vmax.f32 %v835, 0.0
    %v1318 = vmax.f32 %v840, 0.0
    %v1319 = vmax.f32 %v845, 0.0
    %v1320 = vmax.f32 %v850, 0.0
    %v1321 = vmax.f32 %v855, 0.0
    %v1322 = vmax.f32 %v860, 0.0
    %v1323 = vmax.f32 %v865, 0.0
    %v1324 = vmax.f32 %v870, 0.0
    %v1325 = vmax.f32 %v875, 0.0
    %v1326 = vmax.f32 %v880, 0.0
    %v1327 = vmax.f32 %v885, 0.0
    %v1328 = vmax.f32 %v890, 0.0
    %v1329 = vmax.f32 %v895, 0.0
    %v1330 = vmax.f32 %v900, 0.0
    %v1331 = vmax.f32 %v905, 0.0
    %v1332 = vmax.f32 %v910, 0.0
    %v1333 = vmax.f32 %v915, 0.0
    %v1334 = vmax.f32 %v920, 0.0
    %v1335 = vmax.f32 %v925, 0.0
    %v1336 = vmax.f32 %v930, 0.0
    %v1337 = vmax.f32 %v935, 0.0
    %v1338 = vmax.f32 %v940, 0.0
    %v1339 = vmax.f32 %v945, 0.0
    %v1340 = vmax.f32 %v950, 0.0
    %v1341 = vmax.f32 %v955, 0.0
    %v1342 = vmax.f32 %v960, 0.0
    %v1343 = vmax.f32 %v965, 0.0
    %v1344 = vmax.f32 %v970, 0.0
    %v1345 = vmax.f32 %v975, 0.0
    %v1346 = vmax.f32 %v980, 0.0
    %v1347 = vmax.f32 %v985, 0.0
    %v1348 = vmax.f32 %v990, 0.0
    %v1349 = vmax.f32 %v995, 0.0
    %v1350 = vmax.f32 %v1000, 0.0
    %v1351 = vmax.f32 %v1005, 0.0
    %v1352 = vmax.f32 %v1010, 0.0
    %v1353 = vmax.f32 %v1015, 0.0
    %v1354 = vmax.f32 %v1020, 0.0
    %v1355 = vmax.f32 %v1025, 0.0
    %v1356 = vmax.f32 %v1030, 0.0
    %v1357 = vmax.f32 %v1035, 0.0
    %v1358 = vmax.f32 %v1040, 0.0
    %v1359 = vmax.f32 %v1045, 0.0
    %v1360 = vmax.f32 %v1050, 0.0
    %v1361 = vmax.f32 %v1055, 0.0
    %v1362 = vmax.f32 %v1060, 0.0
    %v1363 = vmax.f32 %v1065, 0.0
    %v1364 = vmax.f32 %v1070, 0.0
    %v1365 = vmax.f32 %v1075, 0.0
    %v1366 = vmax.f32 %v1080, 0.0
    %v1367 = vmax.f32 %v1085, 0.0
    %v1368 = vmax.f32 %v1090, 0.0
    %v1369 = vmax.f32 %v1095, 0.0
    %v1370 = vmax.f32 %v1100, 0.0
    %v1371 = vmax.f32 %v1105, 0.0
    %v1372 = vmax.f32 %v1110, 0.0
    %v1373 = vmax.f32 %v1115, 0.0
    %v1374 = vmax.f32 %v1120, 0.0
    %v1375 = vmax.f32 %v1125, 0.0
    %v1376 = vmax.f32 %v1130, 0.0
    %v1377 = vmax.f32 %v1135, 0.0
    %v1378 = vmax.f32 %v1140, 0.0
    %v1379 = vmax.f32 %v1145, 0.0
    %v1380 = vmax.f32 %v1150, 0.0
    %v1381 = vmax.f32 %v1155, 0.0
    %v1382 = vmax.f32 %v1160, 0.0
    %v1383 = vmax.f32 %v1165, 0.0
    %v1384 = vmax.f32 %v1170, 0.0
    %v1385 = vmax.f32 %v1175, 0.0
    %v1386 = vmax.f32 %v1180, 0.0
    %v1387 = vmax.f32 %v1185, 0.0
    %v1388 = vmax.f32 %v1190, 0.0
    %v1389 = vmax.f32 %v1195, 0.0
    %v1390 = vmax.f32 %v1200, 0.0
    %v1391 = vmax.f32 %v1205, 0.0
    %v1392 = vmax.f32 %v1210, 0.0
    %v1393 = vmax.f32 %v1215, 0.0
    %v1394 = vmax.f32 %v1220, 0.0
    %v1395 = vmax.f32 %v1225, 0.0
    %v1396 = vmax.f32 %v1230, 0.0
    %v1397 = vmax.f32 %v1235, 0.0
    %v1398 = vmax.f32 %v1240, 0.0
    %v1399 = vmax.f32 %v1245, 0.0
    %v1400 = vmax.f32 %v1250, 0.0
    %v1401 = vmax.f32 %v1255, 0.0
    %v1402 = vmax.f32 %v1260, 0.0
    %v1403 = vmax.f32 %v1265, 0.0
    %v1404 = vmax.f32 %v1270, 0.0
    %v1405 = vmax.f32 %v1275, 0.0
    %v1406 = vld [vmem:[%s3] sm:$0x1]
    %v1408 = vlaneseq
    %v1409 = vshrl.u32 %v1408, 7
    %v1410 = vsub.s32 0, %v1409
    %v1411 = vrot.slane %v1406, %v1410
    %v1413 = vmul.f32 %v1278, %v1411
    %v1414 = vmul.f32 %v1279, %v1411
    %v1415 = vmul.f32 %v1280, %v1411
    %v1416 = vmul.f32 %v1281, %v1411
    %v1417 = vmul.f32 %v1282, %v1411
    %v1418 = vmul.f32 %v1283, %v1411
    %v1419 = vmul.f32 %v1284, %v1411
    %v1420 = vmul.f32 %v1285, %v1411
    %v1421 = vmul.f32 %v1286, %v1411
    %v1422 = vmul.f32 %v1287, %v1411
    %v1423 = vmul.f32 %v1288, %v1411
    %v1424 = vmul.f32 %v1289, %v1411
    %v1425 = vmul.f32 %v1290, %v1411
    %v1426 = vmul.f32 %v1291, %v1411
    %v1427 = vmul.f32 %v1292, %v1411
    %v1428 = vmul.f32 %v1293, %v1411
    %v1429 = vmul.f32 %v1294, %v1411
    %v1430 = vmul.f32 %v1295, %v1411
    %v1431 = vmul.f32 %v1296, %v1411
    %v1432 = vmul.f32 %v1297, %v1411
    %v1433 = vmul.f32 %v1298, %v1411
    %v1434 = vmul.f32 %v1299, %v1411
    %v1435 = vmul.f32 %v1300, %v1411
    %v1436 = vmul.f32 %v1301, %v1411
    %v1437 = vmul.f32 %v1302, %v1411
    %v1438 = vmul.f32 %v1303, %v1411
    %v1439 = vmul.f32 %v1304, %v1411
    %v1440 = vmul.f32 %v1305, %v1411
    %v1441 = vmul.f32 %v1306, %v1411
    %v1442 = vmul.f32 %v1307, %v1411
    %v1443 = vmul.f32 %v1308, %v1411
    %v1444 = vmul.f32 %v1309, %v1411
    %v1445 = vmul.f32 %v1310, %v1411
    %v1446 = vmul.f32 %v1311, %v1411
    %v1447 = vmul.f32 %v1312, %v1411
    %v1448 = vmul.f32 %v1313, %v1411
    %v1449 = vmul.f32 %v1314, %v1411
    %v1450 = vmul.f32 %v1315, %v1411
    %v1451 = vmul.f32 %v1316, %v1411
    %v1452 = vmul.f32 %v1317, %v1411
    %v1453 = vmul.f32 %v1318, %v1411
    %v1454 = vmul.f32 %v1319, %v1411
    %v1455 = vmul.f32 %v1320, %v1411
    %v1456 = vmul.f32 %v1321, %v1411
    %v1457 = vmul.f32 %v1322, %v1411
    %v1458 = vmul.f32 %v1323, %v1411
    %v1459 = vmul.f32 %v1324, %v1411
    %v1460 = vmul.f32 %v1325, %v1411
    %v1461 = vmul.f32 %v1326, %v1411
    %v1462 = vmul.f32 %v1327, %v1411
    %v1463 = vmul.f32 %v1328, %v1411
    %v1464 = vmul.f32 %v1329, %v1411
    %v1465 = vmul.f32 %v1330, %v1411
    %v1466 = vmul.f32 %v1331, %v1411
    %v1467 = vmul.f32 %v1332, %v1411
    %v1468 = vmul.f32 %v1333, %v1411
    %v1469 = vmul.f32 %v1334, %v1411
    %v1470 = vmul.f32 %v1335, %v1411
    %v1471 = vmul.f32 %v1336, %v1411
    %v1472 = vmul.f32 %v1337, %v1411
    %v1473 = vmul.f32 %v1338, %v1411
    %v1474 = vmul.f32 %v1339, %v1411
    %v1475 = vmul.f32 %v1340, %v1411
    %v1476 = vmul.f32 %v1341, %v1411
    %v1477 = vmul.f32 %v1342, %v1411
    %v1478 = vmul.f32 %v1343, %v1411
    %v1479 = vmul.f32 %v1344, %v1411
    %v1480 = vmul.f32 %v1345, %v1411
    %v1481 = vmul.f32 %v1346, %v1411
    %v1482 = vmul.f32 %v1347, %v1411
    %v1483 = vmul.f32 %v1348, %v1411
    %v1484 = vmul.f32 %v1349, %v1411
    %v1485 = vmul.f32 %v1350, %v1411
    %v1486 = vmul.f32 %v1351, %v1411
    %v1487 = vmul.f32 %v1352, %v1411
    %v1488 = vmul.f32 %v1353, %v1411
    %v1489 = vmul.f32 %v1354, %v1411
    %v1490 = vmul.f32 %v1355, %v1411
    %v1491 = vmul.f32 %v1356, %v1411
    %v1492 = vmul.f32 %v1357, %v1411
    %v1493 = vmul.f32 %v1358, %v1411
    %v1494 = vmul.f32 %v1359, %v1411
    %v1495 = vmul.f32 %v1360, %v1411
    %v1496 = vmul.f32 %v1361, %v1411
    %v1497 = vmul.f32 %v1362, %v1411
    %v1498 = vmul.f32 %v1363, %v1411
    %v1499 = vmul.f32 %v1364, %v1411
    %v1500 = vmul.f32 %v1365, %v1411
    %v1501 = vmul.f32 %v1366, %v1411
    %v1502 = vmul.f32 %v1367, %v1411
    %v1503 = vmul.f32 %v1368, %v1411
    %v1504 = vmul.f32 %v1369, %v1411
    %v1505 = vmul.f32 %v1370, %v1411
    %v1506 = vmul.f32 %v1371, %v1411
    %v1507 = vmul.f32 %v1372, %v1411
    %v1508 = vmul.f32 %v1373, %v1411
    %v1509 = vmul.f32 %v1374, %v1411
    %v1510 = vmul.f32 %v1375, %v1411
    %v1511 = vmul.f32 %v1376, %v1411
    %v1512 = vmul.f32 %v1377, %v1411
    %v1513 = vmul.f32 %v1378, %v1411
    %v1514 = vmul.f32 %v1379, %v1411
    %v1515 = vmul.f32 %v1380, %v1411
    %v1516 = vmul.f32 %v1381, %v1411
    %v1517 = vmul.f32 %v1382, %v1411
    %v1518 = vmul.f32 %v1383, %v1411
    %v1519 = vmul.f32 %v1384, %v1411
    %v1520 = vmul.f32 %v1385, %v1411
    %v1521 = vmul.f32 %v1386, %v1411
    %v1522 = vmul.f32 %v1387, %v1411
    %v1523 = vmul.f32 %v1388, %v1411
    %v1524 = vmul.f32 %v1389, %v1411
    %v1525 = vmul.f32 %v1390, %v1411
    %v1526 = vmul.f32 %v1391, %v1411
    %v1527 = vmul.f32 %v1392, %v1411
    %v1528 = vmul.f32 %v1393, %v1411
    %v1529 = vmul.f32 %v1394, %v1411
    %v1530 = vmul.f32 %v1395, %v1411
    %v1531 = vmul.f32 %v1396, %v1411
    %v1532 = vmul.f32 %v1397, %v1411
    %v1533 = vmul.f32 %v1398, %v1411
    %v1534 = vmul.f32 %v1399, %v1411
    %v1535 = vmul.f32 %v1400, %v1411
    %v1536 = vmul.f32 %v1401, %v1411
    %v1537 = vmul.f32 %v1402, %v1411
    %v1538 = vmul.f32 %v1403, %v1411
    %v1539 = vmul.f32 %v1404, %v1411
    %v1540 = vmul.f32 %v1405, %v1411
    %vm1541 = vcmask 261120
    %v1542 = vsel %vm1541, %v1413, 0.0
    %1543 = vadd.xlane.f32.xlu0 %v1542
    %v1544 = vpop.xlane.xlu0 %1543
    %v1545 = vsel %vm1541, %v1414, 0.0
    %1546 = vadd.xlane.f32.xlu0 %v1545
    %v1547 = vpop.xlane.xlu0 %1546
    %v1548 = vsel %vm1541, %v1415, 0.0
    %1549 = vadd.xlane.f32.xlu0 %v1548
    %v1550 = vpop.xlane.xlu0 %1549
    %v1551 = vsel %vm1541, %v1416, 0.0
    %1552 = vadd.xlane.f32.xlu0 %v1551
    %v1553 = vpop.xlane.xlu0 %1552
    %v1554 = vsel %vm1541, %v1417, 0.0
    %1555 = vadd.xlane.f32.xlu0 %v1554
    %v1556 = vpop.xlane.xlu0 %1555
    %v1557 = vsel %vm1541, %v1418, 0.0
    %1558 = vadd.xlane.f32.xlu0 %v1557
    %v1559 = vpop.xlane.xlu0 %1558
    %v1560 = vsel %vm1541, %v1419, 0.0
    %1561 = vadd.xlane.f32.xlu0 %v1560
    %v1562 = vpop.xlane.xlu0 %1561
    %v1563 = vsel %vm1541, %v1420, 0.0
    %1564 = vadd.xlane.f32.xlu0 %v1563
    %v1565 = vpop.xlane.xlu0 %1564
    %v1566 = vsel %vm1541, %v1421, 0.0
    %1567 = vadd.xlane.f32.xlu0 %v1566
    %v1568 = vpop.xlane.xlu0 %1567
    %v1569 = vsel %vm1541, %v1422, 0.0
    %1570 = vadd.xlane.f32.xlu0 %v1569
    %v1571 = vpop.xlane.xlu0 %1570
    %v1572 = vsel %vm1541, %v1423, 0.0
    %1573 = vadd.xlane.f32.xlu0 %v1572
    %v1574 = vpop.xlane.xlu0 %1573
    %v1575 = vsel %vm1541, %v1424, 0.0
    %1576 = vadd.xlane.f32.xlu0 %v1575
    %v1577 = vpop.xlane.xlu0 %1576
    %v1578 = vsel %vm1541, %v1425, 0.0
    %1579 = vadd.xlane.f32.xlu0 %v1578
    %v1580 = vpop.xlane.xlu0 %1579
    %v1581 = vsel %vm1541, %v1426, 0.0
    %1582 = vadd.xlane.f32.xlu0 %v1581
    %v1583 = vpop.xlane.xlu0 %1582
    %v1584 = vsel %vm1541, %v1427, 0.0
    %1585 = vadd.xlane.f32.xlu0 %v1584
    %v1586 = vpop.xlane.xlu0 %1585
    %v1587 = vsel %vm1541, %v1428, 0.0
    %1588 = vadd.xlane.f32.xlu0 %v1587
    %v1589 = vpop.xlane.xlu0 %1588
    %v1590 = vsel %vm1541, %v1429, 0.0
    %1591 = vadd.xlane.f32.xlu0 %v1590
    %v1592 = vpop.xlane.xlu0 %1591
    %v1593 = vsel %vm1541, %v1430, 0.0
    %1594 = vadd.xlane.f32.xlu0 %v1593
    %v1595 = vpop.xlane.xlu0 %1594
    %v1596 = vsel %vm1541, %v1431, 0.0
    %1597 = vadd.xlane.f32.xlu0 %v1596
    %v1598 = vpop.xlane.xlu0 %1597
    %v1599 = vsel %vm1541, %v1432, 0.0
    %1600 = vadd.xlane.f32.xlu0 %v1599
    %v1601 = vpop.xlane.xlu0 %1600
    %v1602 = vsel %vm1541, %v1433, 0.0
    %1603 = vadd.xlane.f32.xlu0 %v1602
    %v1604 = vpop.xlane.xlu0 %1603
    %v1605 = vsel %vm1541, %v1434, 0.0
    %1606 = vadd.xlane.f32.xlu0 %v1605
    %v1607 = vpop.xlane.xlu0 %1606
    %v1608 = vsel %vm1541, %v1435, 0.0
    %1609 = vadd.xlane.f32.xlu0 %v1608
    %v1610 = vpop.xlane.xlu0 %1609
    %v1611 = vsel %vm1541, %v1436, 0.0
    %1612 = vadd.xlane.f32.xlu0 %v1611
    %v1613 = vpop.xlane.xlu0 %1612
    %v1614 = vsel %vm1541, %v1437, 0.0
    %1615 = vadd.xlane.f32.xlu0 %v1614
    %v1616 = vpop.xlane.xlu0 %1615
    %v1617 = vsel %vm1541, %v1438, 0.0
    %1618 = vadd.xlane.f32.xlu0 %v1617
    %v1619 = vpop.xlane.xlu0 %1618
    %v1620 = vsel %vm1541, %v1439, 0.0
    %1621 = vadd.xlane.f32.xlu0 %v1620
    %v1622 = vpop.xlane.xlu0 %1621
    %v1623 = vsel %vm1541, %v1440, 0.0
    %1624 = vadd.xlane.f32.xlu0 %v1623
    %v1625 = vpop.xlane.xlu0 %1624
    %v1626 = vsel %vm1541, %v1441, 0.0
    %1627 = vadd.xlane.f32.xlu0 %v1626
    %v1628 = vpop.xlane.xlu0 %1627
    %v1629 = vsel %vm1541, %v1442, 0.0
    %1630 = vadd.xlane.f32.xlu0 %v1629
    %v1631 = vpop.xlane.xlu0 %1630
    %v1632 = vsel %vm1541, %v1443, 0.0
    %1633 = vadd.xlane.f32.xlu0 %v1632
    %v1634 = vpop.xlane.xlu0 %1633
    %v1635 = vsel %vm1541, %v1444, 0.0
    %1636 = vadd.xlane.f32.xlu0 %v1635
    %v1637 = vpop.xlane.xlu0 %1636
    %v1638 = vsel %vm1541, %v1445, 0.0
    %1639 = vadd.xlane.f32.xlu0 %v1638
    %v1640 = vpop.xlane.xlu0 %1639
    %v1641 = vsel %vm1541, %v1446, 0.0
    %1642 = vadd.xlane.f32.xlu0 %v1641
    %v1643 = vpop.xlane.xlu0 %1642
    %v1644 = vsel %vm1541, %v1447, 0.0
    %1645 = vadd.xlane.f32.xlu0 %v1644
    %v1646 = vpop.xlane.xlu0 %1645
    %v1647 = vsel %vm1541, %v1448, 0.0
    %1648 = vadd.xlane.f32.xlu0 %v1647
    %v1649 = vpop.xlane.xlu0 %1648
    %v1650 = vsel %vm1541, %v1449, 0.0
    %1651 = vadd.xlane.f32.xlu0 %v1650
    %v1652 = vpop.xlane.xlu0 %1651
    %v1653 = vsel %vm1541, %v1450, 0.0
    %1654 = vadd.xlane.f32.xlu0 %v1653
    %v1655 = vpop.xlane.xlu0 %1654
    %v1656 = vsel %vm1541, %v1451, 0.0
    %1657 = vadd.xlane.f32.xlu0 %v1656
    %v1658 = vpop.xlane.xlu0 %1657
    %v1659 = vsel %vm1541, %v1452, 0.0
    %1660 = vadd.xlane.f32.xlu0 %v1659
    %v1661 = vpop.xlane.xlu0 %1660
    %v1662 = vsel %vm1541, %v1453, 0.0
    %1663 = vadd.xlane.f32.xlu0 %v1662
    %v1664 = vpop.xlane.xlu0 %1663
    %v1665 = vsel %vm1541, %v1454, 0.0
    %1666 = vadd.xlane.f32.xlu0 %v1665
    %v1667 = vpop.xlane.xlu0 %1666
    %v1668 = vsel %vm1541, %v1455, 0.0
    %1669 = vadd.xlane.f32.xlu0 %v1668
    %v1670 = vpop.xlane.xlu0 %1669
    %v1671 = vsel %vm1541, %v1456, 0.0
    %1672 = vadd.xlane.f32.xlu0 %v1671
    %v1673 = vpop.xlane.xlu0 %1672
    %v1674 = vsel %vm1541, %v1457, 0.0
    %1675 = vadd.xlane.f32.xlu0 %v1674
    %v1676 = vpop.xlane.xlu0 %1675
    %v1677 = vsel %vm1541, %v1458, 0.0
    %1678 = vadd.xlane.f32.xlu0 %v1677
    %v1679 = vpop.xlane.xlu0 %1678
    %v1680 = vsel %vm1541, %v1459, 0.0
    %1681 = vadd.xlane.f32.xlu0 %v1680
    %v1682 = vpop.xlane.xlu0 %1681
    %v1683 = vsel %vm1541, %v1460, 0.0
    %1684 = vadd.xlane.f32.xlu0 %v1683
    %v1685 = vpop.xlane.xlu0 %1684
    %v1686 = vsel %vm1541, %v1461, 0.0
    %1687 = vadd.xlane.f32.xlu0 %v1686
    %v1688 = vpop.xlane.xlu0 %1687
    %v1689 = vsel %vm1541, %v1462, 0.0
    %1690 = vadd.xlane.f32.xlu0 %v1689
    %v1691 = vpop.xlane.xlu0 %1690
    %v1692 = vsel %vm1541, %v1463, 0.0
    %1693 = vadd.xlane.f32.xlu0 %v1692
    %v1694 = vpop.xlane.xlu0 %1693
    %v1695 = vsel %vm1541, %v1464, 0.0
    %1696 = vadd.xlane.f32.xlu0 %v1695
    %v1697 = vpop.xlane.xlu0 %1696
    %v1698 = vsel %vm1541, %v1465, 0.0
    %1699 = vadd.xlane.f32.xlu0 %v1698
    %v1700 = vpop.xlane.xlu0 %1699
    %v1701 = vsel %vm1541, %v1466, 0.0
    %1702 = vadd.xlane.f32.xlu0 %v1701
    %v1703 = vpop.xlane.xlu0 %1702
    %v1704 = vsel %vm1541, %v1467, 0.0
    %1705 = vadd.xlane.f32.xlu0 %v1704
    %v1706 = vpop.xlane.xlu0 %1705
    %v1707 = vsel %vm1541, %v1468, 0.0
    %1708 = vadd.xlane.f32.xlu0 %v1707
    %v1709 = vpop.xlane.xlu0 %1708
    %v1710 = vsel %vm1541, %v1469, 0.0
    %1711 = vadd.xlane.f32.xlu0 %v1710
    %v1712 = vpop.xlane.xlu0 %1711
    %v1713 = vsel %vm1541, %v1470, 0.0
    %1714 = vadd.xlane.f32.xlu0 %v1713
    %v1715 = vpop.xlane.xlu0 %1714
    %v1716 = vsel %vm1541, %v1471, 0.0
    %1717 = vadd.xlane.f32.xlu0 %v1716
    %v1718 = vpop.xlane.xlu0 %1717
    %v1719 = vsel %vm1541, %v1472, 0.0
    %1720 = vadd.xlane.f32.xlu0 %v1719
    %v1721 = vpop.xlane.xlu0 %1720
    %v1722 = vsel %vm1541, %v1473, 0.0
    %1723 = vadd.xlane.f32.xlu0 %v1722
    %v1724 = vpop.xlane.xlu0 %1723
    %v1725 = vsel %vm1541, %v1474, 0.0
    %1726 = vadd.xlane.f32.xlu0 %v1725
    %v1727 = vpop.xlane.xlu0 %1726
    %v1728 = vsel %vm1541, %v1475, 0.0
    %1729 = vadd.xlane.f32.xlu0 %v1728
    %v1730 = vpop.xlane.xlu0 %1729
    %v1731 = vsel %vm1541, %v1476, 0.0
    %1732 = vadd.xlane.f32.xlu0 %v1731
    %v1733 = vpop.xlane.xlu0 %1732
    %v1734 = vsel %vm1541, %v1477, 0.0
    %1735 = vadd.xlane.f32.xlu0 %v1734
    %v1736 = vpop.xlane.xlu0 %1735
    %v1737 = vsel %vm1541, %v1478, 0.0
    %1738 = vadd.xlane.f32.xlu0 %v1737
    %v1739 = vpop.xlane.xlu0 %1738
    %v1740 = vsel %vm1541, %v1479, 0.0
    %1741 = vadd.xlane.f32.xlu0 %v1740
    %v1742 = vpop.xlane.xlu0 %1741
    %v1743 = vsel %vm1541, %v1480, 0.0
    %1744 = vadd.xlane.f32.xlu0 %v1743
    %v1745 = vpop.xlane.xlu0 %1744
    %v1746 = vsel %vm1541, %v1481, 0.0
    %1747 = vadd.xlane.f32.xlu0 %v1746
    %v1748 = vpop.xlane.xlu0 %1747
    %v1749 = vsel %vm1541, %v1482, 0.0
    %1750 = vadd.xlane.f32.xlu0 %v1749
    %v1751 = vpop.xlane.xlu0 %1750
    %v1752 = vsel %vm1541, %v1483, 0.0
    %1753 = vadd.xlane.f32.xlu0 %v1752
    %v1754 = vpop.xlane.xlu0 %1753
    %v1755 = vsel %vm1541, %v1484, 0.0
    %1756 = vadd.xlane.f32.xlu0 %v1755
    %v1757 = vpop.xlane.xlu0 %1756
    %v1758 = vsel %vm1541, %v1485, 0.0
    %1759 = vadd.xlane.f32.xlu0 %v1758
    %v1760 = vpop.xlane.xlu0 %1759
    %v1761 = vsel %vm1541, %v1486, 0.0
    %1762 = vadd.xlane.f32.xlu0 %v1761
    %v1763 = vpop.xlane.xlu0 %1762
    %v1764 = vsel %vm1541, %v1487, 0.0
    %1765 = vadd.xlane.f32.xlu0 %v1764
    %v1766 = vpop.xlane.xlu0 %1765
    %v1767 = vsel %vm1541, %v1488, 0.0
    %1768 = vadd.xlane.f32.xlu0 %v1767
    %v1769 = vpop.xlane.xlu0 %1768
    %v1770 = vsel %vm1541, %v1489, 0.0
    %1771 = vadd.xlane.f32.xlu0 %v1770
    %v1772 = vpop.xlane.xlu0 %1771
    %v1773 = vsel %vm1541, %v1490, 0.0
    %1774 = vadd.xlane.f32.xlu0 %v1773
    %v1775 = vpop.xlane.xlu0 %1774
    %v1776 = vsel %vm1541, %v1491, 0.0
    %1777 = vadd.xlane.f32.xlu0 %v1776
    %v1778 = vpop.xlane.xlu0 %1777
    %v1779 = vsel %vm1541, %v1492, 0.0
    %1780 = vadd.xlane.f32.xlu0 %v1779
    %v1781 = vpop.xlane.xlu0 %1780
    %v1782 = vsel %vm1541, %v1493, 0.0
    %1783 = vadd.xlane.f32.xlu0 %v1782
    %v1784 = vpop.xlane.xlu0 %1783
    %v1785 = vsel %vm1541, %v1494, 0.0
    %1786 = vadd.xlane.f32.xlu0 %v1785
    %v1787 = vpop.xlane.xlu0 %1786
    %v1788 = vsel %vm1541, %v1495, 0.0
    %1789 = vadd.xlane.f32.xlu0 %v1788
    %v1790 = vpop.xlane.xlu0 %1789
    %v1791 = vsel %vm1541, %v1496, 0.0
    %1792 = vadd.xlane.f32.xlu0 %v1791
    %v1793 = vpop.xlane.xlu0 %1792
    %v1794 = vsel %vm1541, %v1497, 0.0
    %1795 = vadd.xlane.f32.xlu0 %v1794
    %v1796 = vpop.xlane.xlu0 %1795
    %v1797 = vsel %vm1541, %v1498, 0.0
    %1798 = vadd.xlane.f32.xlu0 %v1797
    %v1799 = vpop.xlane.xlu0 %1798
    %v1800 = vsel %vm1541, %v1499, 0.0
    %1801 = vadd.xlane.f32.xlu0 %v1800
    %v1802 = vpop.xlane.xlu0 %1801
    %v1803 = vsel %vm1541, %v1500, 0.0
    %1804 = vadd.xlane.f32.xlu0 %v1803
    %v1805 = vpop.xlane.xlu0 %1804
    %v1806 = vsel %vm1541, %v1501, 0.0
    %1807 = vadd.xlane.f32.xlu0 %v1806
    %v1808 = vpop.xlane.xlu0 %1807
    %v1809 = vsel %vm1541, %v1502, 0.0
    %1810 = vadd.xlane.f32.xlu0 %v1809
    %v1811 = vpop.xlane.xlu0 %1810
    %v1812 = vsel %vm1541, %v1503, 0.0
    %1813 = vadd.xlane.f32.xlu0 %v1812
    %v1814 = vpop.xlane.xlu0 %1813
    %v1815 = vsel %vm1541, %v1504, 0.0
    %1816 = vadd.xlane.f32.xlu0 %v1815
    %v1817 = vpop.xlane.xlu0 %1816
    %v1818 = vsel %vm1541, %v1505, 0.0
    %1819 = vadd.xlane.f32.xlu0 %v1818
    %v1820 = vpop.xlane.xlu0 %1819
    %v1821 = vsel %vm1541, %v1506, 0.0
    %1822 = vadd.xlane.f32.xlu0 %v1821
    %v1823 = vpop.xlane.xlu0 %1822
    %v1824 = vsel %vm1541, %v1507, 0.0
    %1825 = vadd.xlane.f32.xlu0 %v1824
    %v1826 = vpop.xlane.xlu0 %1825
    %v1827 = vsel %vm1541, %v1508, 0.0
    %1828 = vadd.xlane.f32.xlu0 %v1827
    %v1829 = vpop.xlane.xlu0 %1828
    %v1830 = vsel %vm1541, %v1509, 0.0
    %1831 = vadd.xlane.f32.xlu0 %v1830
    %v1832 = vpop.xlane.xlu0 %1831
    %v1833 = vsel %vm1541, %v1510, 0.0
    %1834 = vadd.xlane.f32.xlu0 %v1833
    %v1835 = vpop.xlane.xlu0 %1834
    %v1836 = vsel %vm1541, %v1511, 0.0
    %1837 = vadd.xlane.f32.xlu0 %v1836
    %v1838 = vpop.xlane.xlu0 %1837
    %v1839 = vsel %vm1541, %v1512, 0.0
    %1840 = vadd.xlane.f32.xlu0 %v1839
    %v1841 = vpop.xlane.xlu0 %1840
    %v1842 = vsel %vm1541, %v1513, 0.0
    %1843 = vadd.xlane.f32.xlu0 %v1842
    %v1844 = vpop.xlane.xlu0 %1843
    %v1845 = vsel %vm1541, %v1514, 0.0
    %1846 = vadd.xlane.f32.xlu0 %v1845
    %v1847 = vpop.xlane.xlu0 %1846
    %v1848 = vsel %vm1541, %v1515, 0.0
    %1849 = vadd.xlane.f32.xlu0 %v1848
    %v1850 = vpop.xlane.xlu0 %1849
    %v1851 = vsel %vm1541, %v1516, 0.0
    %1852 = vadd.xlane.f32.xlu0 %v1851
    %v1853 = vpop.xlane.xlu0 %1852
    %v1854 = vsel %vm1541, %v1517, 0.0
    %1855 = vadd.xlane.f32.xlu0 %v1854
    %v1856 = vpop.xlane.xlu0 %1855
    %v1857 = vsel %vm1541, %v1518, 0.0
    %1858 = vadd.xlane.f32.xlu0 %v1857
    %v1859 = vpop.xlane.xlu0 %1858
    %v1860 = vsel %vm1541, %v1519, 0.0
    %1861 = vadd.xlane.f32.xlu0 %v1860
    %v1862 = vpop.xlane.xlu0 %1861
    %v1863 = vsel %vm1541, %v1520, 0.0
    %1864 = vadd.xlane.f32.xlu0 %v1863
    %v1865 = vpop.xlane.xlu0 %1864
    %v1866 = vsel %vm1541, %v1521, 0.0
    %1867 = vadd.xlane.f32.xlu0 %v1866
    %v1868 = vpop.xlane.xlu0 %1867
    %v1869 = vsel %vm1541, %v1522, 0.0
    %1870 = vadd.xlane.f32.xlu0 %v1869
    %v1871 = vpop.xlane.xlu0 %1870
    %v1872 = vsel %vm1541, %v1523, 0.0
    %1873 = vadd.xlane.f32.xlu0 %v1872
    %v1874 = vpop.xlane.xlu0 %1873
    %v1875 = vsel %vm1541, %v1524, 0.0
    %1876 = vadd.xlane.f32.xlu0 %v1875
    %v1877 = vpop.xlane.xlu0 %1876
    %v1878 = vsel %vm1541, %v1525, 0.0
    %1879 = vadd.xlane.f32.xlu0 %v1878
    %v1880 = vpop.xlane.xlu0 %1879
    %v1881 = vsel %vm1541, %v1526, 0.0
    %1882 = vadd.xlane.f32.xlu0 %v1881
    %v1883 = vpop.xlane.xlu0 %1882
    %v1884 = vsel %vm1541, %v1527, 0.0
    %1885 = vadd.xlane.f32.xlu0 %v1884
    %v1886 = vpop.xlane.xlu0 %1885
    %v1887 = vsel %vm1541, %v1528, 0.0
    %1888 = vadd.xlane.f32.xlu0 %v1887
    %v1889 = vpop.xlane.xlu0 %1888
    %v1890 = vsel %vm1541, %v1529, 0.0
    %1891 = vadd.xlane.f32.xlu0 %v1890
    %v1892 = vpop.xlane.xlu0 %1891
    %v1893 = vsel %vm1541, %v1530, 0.0
    %1894 = vadd.xlane.f32.xlu0 %v1893
    %v1895 = vpop.xlane.xlu0 %1894
    %v1896 = vsel %vm1541, %v1531, 0.0
    %1897 = vadd.xlane.f32.xlu0 %v1896
    %v1898 = vpop.xlane.xlu0 %1897
    %v1899 = vsel %vm1541, %v1532, 0.0
    %1900 = vadd.xlane.f32.xlu0 %v1899
    %v1901 = vpop.xlane.xlu0 %1900
    %v1902 = vsel %vm1541, %v1533, 0.0
    %1903 = vadd.xlane.f32.xlu0 %v1902
    %v1904 = vpop.xlane.xlu0 %1903
    %v1905 = vsel %vm1541, %v1534, 0.0
    %1906 = vadd.xlane.f32.xlu0 %v1905
    %v1907 = vpop.xlane.xlu0 %1906
    %v1908 = vsel %vm1541, %v1535, 0.0
    %1909 = vadd.xlane.f32.xlu0 %v1908
    %v1910 = vpop.xlane.xlu0 %1909
    %v1911 = vsel %vm1541, %v1536, 0.0
    %1912 = vadd.xlane.f32.xlu0 %v1911
    %v1913 = vpop.xlane.xlu0 %1912
    %v1914 = vsel %vm1541, %v1537, 0.0
    %1915 = vadd.xlane.f32.xlu0 %v1914
    %v1916 = vpop.xlane.xlu0 %1915
    %v1917 = vsel %vm1541, %v1538, 0.0
    %1918 = vadd.xlane.f32.xlu0 %v1917
    %v1919 = vpop.xlane.xlu0 %1918
    %v1920 = vsel %vm1541, %v1539, 0.0
    %1921 = vadd.xlane.f32.xlu0 %v1920
    %v1922 = vpop.xlane.xlu0 %1921
    %v1923 = vsel %vm1541, %v1540, 0.0
    %1924 = vadd.xlane.f32.xlu0 %v1923
    %v1925 = vpop.xlane.xlu0 %1924
    %v1926 = vld [vmem:[#allocation2] sm:$0x1]
    %v1928 = vlaneseq
    %v1929 = vshrl.u32 %v1928, 7
    %v1930 = vsub.s32 0, %v1929
    %v1931 = vrot.slane %v1926, %v1930
    %1932 = vset.pattern.permute.xlu0 0
    %1933 = vperm.xlu0 %1932, %v1931
    %v1934 = vpop.permute.xlu0 %1933
    %v1936 = vadd.f32 %v1544, %v1934
    %v1937 = vadd.f32 %v1547, %v1934
    %v1938 = vadd.f32 %v1550, %v1934
    %v1939 = vadd.f32 %v1553, %v1934
    %v1940 = vadd.f32 %v1556, %v1934
    %v1941 = vadd.f32 %v1559, %v1934
    %v1942 = vadd.f32 %v1562, %v1934
    %v1943 = vadd.f32 %v1565, %v1934
    %v1944 = vadd.f32 %v1568, %v1934
    %v1945 = vadd.f32 %v1571, %v1934
    %v1946 = vadd.f32 %v1574, %v1934
    %v1947 = vadd.f32 %v1577, %v1934
    %v1948 = vadd.f32 %v1580, %v1934
    %v1949 = vadd.f32 %v1583, %v1934
    %v1950 = vadd.f32 %v1586, %v1934
    %v1951 = vadd.f32 %v1589, %v1934
    %v1952 = vadd.f32 %v1592, %v1934
    %v1953 = vadd.f32 %v1595, %v1934
    %v1954 = vadd.f32 %v1598, %v1934
    %v1955 = vadd.f32 %v1601, %v1934
    %v1956 = vadd.f32 %v1604, %v1934
    %v1957 = vadd.f32 %v1607, %v1934
    %v1958 = vadd.f32 %v1610, %v1934
    %v1959 = vadd.f32 %v1613, %v1934
    %v1960 = vadd.f32 %v1616, %v1934
    %v1961 = vadd.f32 %v1619, %v1934
    %v1962 = vadd.f32 %v1622, %v1934
    %v1963 = vadd.f32 %v1625, %v1934
    %v1964 = vadd.f32 %v1628, %v1934
    %v1965 = vadd.f32 %v1631, %v1934
    %v1966 = vadd.f32 %v1634, %v1934
    %v1967 = vadd.f32 %v1637, %v1934
    %v1968 = vadd.f32 %v1640, %v1934
    %v1969 = vadd.f32 %v1643, %v1934
    %v1970 = vadd.f32 %v1646, %v1934
    %v1971 = vadd.f32 %v1649, %v1934
    %v1972 = vadd.f32 %v1652, %v1934
    %v1973 = vadd.f32 %v1655, %v1934
    %v1974 = vadd.f32 %v1658, %v1934
    %v1975 = vadd.f32 %v1661, %v1934
    %v1976 = vadd.f32 %v1664, %v1934
    %v1977 = vadd.f32 %v1667, %v1934
    %v1978 = vadd.f32 %v1670, %v1934
    %v1979 = vadd.f32 %v1673, %v1934
    %v1980 = vadd.f32 %v1676, %v1934
    %v1981 = vadd.f32 %v1679, %v1934
    %v1982 = vadd.f32 %v1682, %v1934
    %v1983 = vadd.f32 %v1685, %v1934
    %v1984 = vadd.f32 %v1688, %v1934
    %v1985 = vadd.f32 %v1691, %v1934
    %v1986 = vadd.f32 %v1694, %v1934
    %v1987 = vadd.f32 %v1697, %v1934
    %v1988 = vadd.f32 %v1700, %v1934
    %v1989 = vadd.f32 %v1703, %v1934
    %v1990 = vadd.f32 %v1706, %v1934
    %v1991 = vadd.f32 %v1709, %v1934
    %v1992 = vadd.f32 %v1712, %v1934
    %v1993 = vadd.f32 %v1715, %v1934
    %v1994 = vadd.f32 %v1718, %v1934
    %v1995 = vadd.f32 %v1721, %v1934
    %v1996 = vadd.f32 %v1724, %v1934
    %v1997 = vadd.f32 %v1727, %v1934
    %v1998 = vadd.f32 %v1730, %v1934
    %v1999 = vadd.f32 %v1733, %v1934
    %v2000 = vadd.f32 %v1736, %v1934
    %v2001 = vadd.f32 %v1739, %v1934
    %v2002 = vadd.f32 %v1742, %v1934
    %v2003 = vadd.f32 %v1745, %v1934
    %v2004 = vadd.f32 %v1748, %v1934
    %v2005 = vadd.f32 %v1751, %v1934
    %v2006 = vadd.f32 %v1754, %v1934
    %v2007 = vadd.f32 %v1757, %v1934
    %v2008 = vadd.f32 %v1760, %v1934
    %v2009 = vadd.f32 %v1763, %v1934
    %v2010 = vadd.f32 %v1766, %v1934
    %v2011 = vadd.f32 %v1769, %v1934
    %v2012 = vadd.f32 %v1772, %v1934
    %v2013 = vadd.f32 %v1775, %v1934
    %v2014 = vadd.f32 %v1778, %v1934
    %v2015 = vadd.f32 %v1781, %v1934
    %v2016 = vadd.f32 %v1784, %v1934
    %v2017 = vadd.f32 %v1787, %v1934
    %v2018 = vadd.f32 %v1790, %v1934
    %v2019 = vadd.f32 %v1793, %v1934
    %v2020 = vadd.f32 %v1796, %v1934
    %v2021 = vadd.f32 %v1799, %v1934
    %v2022 = vadd.f32 %v1802, %v1934
    %v2023 = vadd.f32 %v1805, %v1934
    %v2024 = vadd.f32 %v1808, %v1934
    %v2025 = vadd.f32 %v1811, %v1934
    %v2026 = vadd.f32 %v1814, %v1934
    %v2027 = vadd.f32 %v1817, %v1934
    %v2028 = vadd.f32 %v1820, %v1934
    %v2029 = vadd.f32 %v1823, %v1934
    %v2030 = vadd.f32 %v1826, %v1934
    %v2031 = vadd.f32 %v1829, %v1934
    %v2032 = vadd.f32 %v1832, %v1934
    %v2033 = vadd.f32 %v1835, %v1934
    %v2034 = vadd.f32 %v1838, %v1934
    %v2035 = vadd.f32 %v1841, %v1934
    %v2036 = vadd.f32 %v1844, %v1934
    %v2037 = vadd.f32 %v1847, %v1934
    %v2038 = vadd.f32 %v1850, %v1934
    %v2039 = vadd.f32 %v1853, %v1934
    %v2040 = vadd.f32 %v1856, %v1934
    %v2041 = vadd.f32 %v1859, %v1934
    %v2042 = vadd.f32 %v1862, %v1934
    %v2043 = vadd.f32 %v1865, %v1934
    %v2044 = vadd.f32 %v1868, %v1934
    %v2045 = vadd.f32 %v1871, %v1934
    %v2046 = vadd.f32 %v1874, %v1934
    %v2047 = vadd.f32 %v1877, %v1934
    %v2048 = vadd.f32 %v1880, %v1934
    %v2049 = vadd.f32 %v1883, %v1934
    %v2050 = vadd.f32 %v1886, %v1934
    %v2051 = vadd.f32 %v1889, %v1934
    %v2052 = vadd.f32 %v1892, %v1934
    %v2053 = vadd.f32 %v1895, %v1934
    %v2054 = vadd.f32 %v1898, %v1934
    %v2055 = vadd.f32 %v1901, %v1934
    %v2056 = vadd.f32 %v1904, %v1934
    %v2057 = vadd.f32 %v1907, %v1934
    %v2058 = vadd.f32 %v1910, %v1934
    %v2059 = vadd.f32 %v1913, %v1934
    %v2060 = vadd.f32 %v1916, %v1934
    %v2061 = vadd.f32 %v1919, %v1934
    %v2062 = vadd.f32 %v1922, %v1934
    %v2063 = vadd.f32 %v1925, %v1934
    %v2192 = vlaneseq
    %v2193 = vand.u32 %v2192, 127
    %v2194 = vlaneseq
    %v2195 = vshrl.u32 %v2194, 7
    %v2196 = vsub.s32 %v2193, %v2195
    %v2197 = vrot.slane %v1936, %v2196
    %v2198 = vadd.s32 %v2193, 4294967288
    %v2199 = vlaneseq
    %v2200 = vshrl.u32 %v2199, 7
    %v2201 = vsub.s32 %v2198, %v2200
    %v2202 = vrot.slane %v1937, %v2201
    %vm2203 = vcmask 130112
    %v2204 = vsel %vm2203, %v2202, %v2197
    %v2205 = vadd.s32 %v2193, 4294967280
    %v2206 = vlaneseq
    %v2207 = vshrl.u32 %v2206, 7
    %v2208 = vsub.s32 %v2205, %v2207
    %v2209 = vrot.slane %v1938, %v2208
    %vm2210 = vcmask 195712
    %v2211 = vsel %vm2210, %v2209, %v2204
    %v2212 = vadd.s32 %v2193, 4294967272
    %v2213 = vlaneseq
    %v2214 = vshrl.u32 %v2213, 7
    %v2215 = vsub.s32 %v2212, %v2214
    %v2216 = vrot.slane %v1939, %v2215
    %vm2217 = vcmask 261312
    %v2218 = vsel %vm2217, %v2216, %v2211
    %v2219 = vadd.s32 %v2193, 4294967264
    %v2220 = vlaneseq
    %v2221 = vshrl.u32 %v2220, 7
    %v2222 = vsub.s32 %v2219, %v2221
    %v2223 = vrot.slane %v1940, %v2222
    %vm2224 = vcmask 326912
    %v2225 = vsel %vm2224, %v2223, %v2218
    %v2226 = vadd.s32 %v2193, 4294967256
    %v2227 = vlaneseq
    %v2228 = vshrl.u32 %v2227, 7
    %v2229 = vsub.s32 %v2226, %v2228
    %v2230 = vrot.slane %v1941, %v2229
    %vm2231 = vcmask 392512
    %v2232 = vsel %vm2231, %v2230, %v2225
    %v2233 = vadd.s32 %v2193, 4294967248
    %v2234 = vlaneseq
    %v2235 = vshrl.u32 %v2234, 7
    %v2236 = vsub.s32 %v2233, %v2235
    %v2237 = vrot.slane %v1942, %v2236
    %vm2238 = vcmask 458112
    %v2239 = vsel %vm2238, %v2237, %v2232
    %v2240 = vadd.s32 %v2193, 4294967240
    %v2241 = vlaneseq
    %v2242 = vshrl.u32 %v2241, 7
    %v2243 = vsub.s32 %v2240, %v2242
    %v2244 = vrot.slane %v1943, %v2243
    %vm2245 = vcmask 523712
    %v2246 = vsel %vm2245, %v2244, %v2239
    %v2247 = vadd.s32 %v2193, 4294967232
    %v2248 = vlaneseq
    %v2249 = vshrl.u32 %v2248, 7
    %v2250 = vsub.s32 %v2247, %v2249
    %v2251 = vrot.slane %v1944, %v2250
    %vm2252 = vcmask 589312
    %v2253 = vsel %vm2252, %v2251, %v2246
    %v2254 = vadd.s32 %v2193, 4294967224
    %v2255 = vlaneseq
    %v2256 = vshrl.u32 %v2255, 7
    %v2257 = vsub.s32 %v2254, %v2256
    %v2258 = vrot.slane %v1945, %v2257
    %vm2259 = vcmask 654912
    %v2260 = vsel %vm2259, %v2258, %v2253
    %v2261 = vadd.s32 %v2193, 4294967216
    %v2262 = vlaneseq
    %v2263 = vshrl.u32 %v2262, 7
    %v2264 = vsub.s32 %v2261, %v2263
    %v2265 = vrot.slane %v1946, %v2264
    %vm2266 = vcmask 720512
    %v2267 = vsel %vm2266, %v2265, %v2260
    %v2268 = vadd.s32 %v2193, 4294967208
    %v2269 = vlaneseq
    %v2270 = vshrl.u32 %v2269, 7
    %v2271 = vsub.s32 %v2268, %v2270
    %v2272 = vrot.slane %v1947, %v2271
    %vm2273 = vcmask 786112
    %v2274 = vsel %vm2273, %v2272, %v2267
    %v2275 = vadd.s32 %v2193, 4294967200
    %v2276 = vlaneseq
    %v2277 = vshrl.u32 %v2276, 7
    %v2278 = vsub.s32 %v2275, %v2277
    %v2279 = vrot.slane %v1948, %v2278
    %vm2280 = vcmask 851712
    %v2281 = vsel %vm2280, %v2279, %v2274
    %v2282 = vadd.s32 %v2193, 4294967192
    %v2283 = vlaneseq
    %v2284 = vshrl.u32 %v2283, 7
    %v2285 = vsub.s32 %v2282, %v2284
    %v2286 = vrot.slane %v1949, %v2285
    %vm2287 = vcmask 917312
    %v2288 = vsel %vm2287, %v2286, %v2281
    %v2289 = vadd.s32 %v2193, 4294967184
    %v2290 = vlaneseq
    %v2291 = vshrl.u32 %v2290, 7
    %v2292 = vsub.s32 %v2289, %v2291
    %v2293 = vrot.slane %v1950, %v2292
    %vm2294 = vcmask 982912
    %v2295 = vsel %vm2294, %v2293, %v2288
    %v2296 = vadd.s32 %v2193, 4294967176
    %v2297 = vlaneseq
    %v2298 = vshrl.u32 %v2297, 7
    %v2299 = vsub.s32 %v2296, %v2298
    %v2300 = vrot.slane %v1951, %v2299
    %vm2301 = vcmask 1048512
    %v2302 = vsel %vm2301, %v2300, %v2295
    %v2303 = vlaneseq
    %v2304 = vshrl.u32 %v2303, 7
    %v2305 = vsub.s32 %v2193, %v2304
    %v2306 = vrot.slane %v1952, %v2305
    %v2307 = vlaneseq
    %v2308 = vshrl.u32 %v2307, 7
    %v2309 = vsub.s32 %v2198, %v2308
    %v2310 = vrot.slane %v1953, %v2309
    %v2311 = vsel %vm2203, %v2310, %v2306
    %v2312 = vlaneseq
    %v2313 = vshrl.u32 %v2312, 7
    %v2314 = vsub.s32 %v2205, %v2313
    %v2315 = vrot.slane %v1954, %v2314
    %v2316 = vsel %vm2210, %v2315, %v2311
    %v2317 = vlaneseq
    %v2318 = vshrl.u32 %v2317, 7
    %v2319 = vsub.s32 %v2212, %v2318
    %v2320 = vrot.slane %v1955, %v2319
    %v2321 = vsel %vm2217, %v2320, %v2316
    %v2322 = vlaneseq
    %v2323 = vshrl.u32 %v2322, 7
    %v2324 = vsub.s32 %v2219, %v2323
    %v2325 = vrot.slane %v1956, %v2324
    %v2326 = vsel %vm2224, %v2325, %v2321
    %v2327 = vlaneseq
    %v2328 = vshrl.u32 %v2327, 7
    %v2329 = vsub.s32 %v2226, %v2328
    %v2330 = vrot.slane %v1957, %v2329
    %v2331 = vsel %vm2231, %v2330, %v2326
    %v2332 = vlaneseq
    %v2333 = vshrl.u32 %v2332, 7
    %v2334 = vsub.s32 %v2233, %v2333
    %v2335 = vrot.slane %v1958, %v2334
    %v2336 = vsel %vm2238, %v2335, %v2331
    %v2337 = vlaneseq
    %v2338 = vshrl.u32 %v2337, 7
    %v2339 = vsub.s32 %v2240, %v2338
    %v2340 = vrot.slane %v1959, %v2339
    %v2341 = vsel %vm2245, %v2340, %v2336
    %v2342 = vlaneseq
    %v2343 = vshrl.u32 %v2342, 7
    %v2344 = vsub.s32 %v2247, %v2343
    %v2345 = vrot.slane %v1960, %v2344
    %v2346 = vsel %vm2252, %v2345, %v2341
    %v2347 = vlaneseq
    %v2348 = vshrl.u32 %v2347, 7
    %v2349 = vsub.s32 %v2254, %v2348
    %v2350 = vrot.slane %v1961, %v2349
    %v2351 = vsel %vm2259, %v2350, %v2346
    %v2352 = vlaneseq
    %v2353 = vshrl.u32 %v2352, 7
    %v2354 = vsub.s32 %v2261, %v2353
    %v2355 = vrot.slane %v1962, %v2354
    %v2356 = vsel %vm2266, %v2355, %v2351
    %v2357 = vlaneseq
    %v2358 = vshrl.u32 %v2357, 7
    %v2359 = vsub.s32 %v2268, %v2358
    %v2360 = vrot.slane %v1963, %v2359
    %v2361 = vsel %vm2273, %v2360, %v2356
    %v2362 = vlaneseq
    %v2363 = vshrl.u32 %v2362, 7
    %v2364 = vsub.s32 %v2275, %v2363
    %v2365 = vrot.slane %v1964, %v2364
    %v2366 = vsel %vm2280, %v2365, %v2361
    %v2367 = vlaneseq
    %v2368 = vshrl.u32 %v2367, 7
    %v2369 = vsub.s32 %v2282, %v2368
    %v2370 = vrot.slane %v1965, %v2369
    %v2371 = vsel %vm2287, %v2370, %v2366
    %v2372 = vlaneseq
    %v2373 = vshrl.u32 %v2372, 7
    %v2374 = vsub.s32 %v2289, %v2373
    %v2375 = vrot.slane %v1966, %v2374
    %v2376 = vsel %vm2294, %v2375, %v2371
    %v2377 = vlaneseq
    %v2378 = vshrl.u32 %v2377, 7
    %v2379 = vsub.s32 %v2296, %v2378
    %v2380 = vrot.slane %v1967, %v2379
    %v2381 = vsel %vm2301, %v2380, %v2376
    %v2382 = vlaneseq
    %v2383 = vshrl.u32 %v2382, 7
    %v2384 = vsub.s32 %v2193, %v2383
    %v2385 = vrot.slane %v1968, %v2384
    %v2386 = vlaneseq
    %v2387 = vshrl.u32 %v2386, 7
    %v2388 = vsub.s32 %v2198, %v2387
    %v2389 = vrot.slane %v1969, %v2388
    %v2390 = vsel %vm2203, %v2389, %v2385
    %v2391 = vlaneseq
    %v2392 = vshrl.u32 %v2391, 7
    %v2393 = vsub.s32 %v2205, %v2392
    %v2394 = vrot.slane %v1970, %v2393
    %v2395 = vsel %vm2210, %v2394, %v2390
    %v2396 = vlaneseq
    %v2397 = vshrl.u32 %v2396, 7
    %v2398 = vsub.s32 %v2212, %v2397
    %v2399 = vrot.slane %v1971, %v2398
    %v2400 = vsel %vm2217, %v2399, %v2395
    %v2401 = vlaneseq
    %v2402 = vshrl.u32 %v2401, 7
    %v2403 = vsub.s32 %v2219, %v2402
    %v2404 = vrot.slane %v1972, %v2403
    %v2405 = vsel %vm2224, %v2404, %v2400
    %v2406 = vlaneseq
    %v2407 = vshrl.u32 %v2406, 7
    %v2408 = vsub.s32 %v2226, %v2407
    %v2409 = vrot.slane %v1973, %v2408
    %v2410 = vsel %vm2231, %v2409, %v2405
    %v2411 = vlaneseq
    %v2412 = vshrl.u32 %v2411, 7
    %v2413 = vsub.s32 %v2233, %v2412
    %v2414 = vrot.slane %v1974, %v2413
    %v2415 = vsel %vm2238, %v2414, %v2410
    %v2416 = vlaneseq
    %v2417 = vshrl.u32 %v2416, 7
    %v2418 = vsub.s32 %v2240, %v2417
    %v2419 = vrot.slane %v1975, %v2418
    %v2420 = vsel %vm2245, %v2419, %v2415
    %v2421 = vlaneseq
    %v2422 = vshrl.u32 %v2421, 7
    %v2423 = vsub.s32 %v2247, %v2422
    %v2424 = vrot.slane %v1976, %v2423
    %v2425 = vsel %vm2252, %v2424, %v2420
    %v2426 = vlaneseq
    %v2427 = vshrl.u32 %v2426, 7
    %v2428 = vsub.s32 %v2254, %v2427
    %v2429 = vrot.slane %v1977, %v2428
    %v2430 = vsel %vm2259, %v2429, %v2425
    %v2431 = vlaneseq
    %v2432 = vshrl.u32 %v2431, 7
    %v2433 = vsub.s32 %v2261, %v2432
    %v2434 = vrot.slane %v1978, %v2433
    %v2435 = vsel %vm2266, %v2434, %v2430
    %v2436 = vlaneseq
    %v2437 = vshrl.u32 %v2436, 7
    %v2438 = vsub.s32 %v2268, %v2437
    %v2439 = vrot.slane %v1979, %v2438
    %v2440 = vsel %vm2273, %v2439, %v2435
    %v2441 = vlaneseq
    %v2442 = vshrl.u32 %v2441, 7
    %v2443 = vsub.s32 %v2275, %v2442
    %v2444 = vrot.slane %v1980, %v2443
    %v2445 = vsel %vm2280, %v2444, %v2440
    %v2446 = vlaneseq
    %v2447 = vshrl.u32 %v2446, 7
    %v2448 = vsub.s32 %v2282, %v2447
    %v2449 = vrot.slane %v1981, %v2448
    %v2450 = vsel %vm2287, %v2449, %v2445
    %v2451 = vlaneseq
    %v2452 = vshrl.u32 %v2451, 7
    %v2453 = vsub.s32 %v2289, %v2452
    %v2454 = vrot.slane %v1982, %v2453
    %v2455 = vsel %vm2294, %v2454, %v2450
    %v2456 = vlaneseq
    %v2457 = vshrl.u32 %v2456, 7
    %v2458 = vsub.s32 %v2296, %v2457
    %v2459 = vrot.slane %v1983, %v2458
    %v2460 = vsel %vm2301, %v2459, %v2455
    %v2461 = vlaneseq
    %v2462 = vshrl.u32 %v2461, 7
    %v2463 = vsub.s32 %v2193, %v2462
    %v2464 = vrot.slane %v1984, %v2463
    %v2465 = vlaneseq
    %v2466 = vshrl.u32 %v2465, 7
    %v2467 = vsub.s32 %v2198, %v2466
    %v2468 = vrot.slane %v1985, %v2467
    %v2469 = vsel %vm2203, %v2468, %v2464
    %v2470 = vlaneseq
    %v2471 = vshrl.u32 %v2470, 7
    %v2472 = vsub.s32 %v2205, %v2471
    %v2473 = vrot.slane %v1986, %v2472
    %v2474 = vsel %vm2210, %v2473, %v2469
    %v2475 = vlaneseq
    %v2476 = vshrl.u32 %v2475, 7
    %v2477 = vsub.s32 %v2212, %v2476
    %v2478 = vrot.slane %v1987, %v2477
    %v2479 = vsel %vm2217, %v2478, %v2474
    %v2480 = vlaneseq
    %v2481 = vshrl.u32 %v2480, 7
    %v2482 = vsub.s32 %v2219, %v2481
    %v2483 = vrot.slane %v1988, %v2482
    %v2484 = vsel %vm2224, %v2483, %v2479
    %v2485 = vlaneseq
    %v2486 = vshrl.u32 %v2485, 7
    %v2487 = vsub.s32 %v2226, %v2486
    %v2488 = vrot.slane %v1989, %v2487
    %v2489 = vsel %vm2231, %v2488, %v2484
    %v2490 = vlaneseq
    %v2491 = vshrl.u32 %v2490, 7
    %v2492 = vsub.s32 %v2233, %v2491
    %v2493 = vrot.slane %v1990, %v2492
    %v2494 = vsel %vm2238, %v2493, %v2489
    %v2495 = vlaneseq
    %v2496 = vshrl.u32 %v2495, 7
    %v2497 = vsub.s32 %v2240, %v2496
    %v2498 = vrot.slane %v1991, %v2497
    %v2499 = vsel %vm2245, %v2498, %v2494
    %v2500 = vlaneseq
    %v2501 = vshrl.u32 %v2500, 7
    %v2502 = vsub.s32 %v2247, %v2501
    %v2503 = vrot.slane %v1992, %v2502
    %v2504 = vsel %vm2252, %v2503, %v2499
    %v2505 = vlaneseq
    %v2506 = vshrl.u32 %v2505, 7
    %v2507 = vsub.s32 %v2254, %v2506
    %v2508 = vrot.slane %v1993, %v2507
    %v2509 = vsel %vm2259, %v2508, %v2504
    %v2510 = vlaneseq
    %v2511 = vshrl.u32 %v2510, 7
    %v2512 = vsub.s32 %v2261, %v2511
    %v2513 = vrot.slane %v1994, %v2512
    %v2514 = vsel %vm2266, %v2513, %v2509
    %v2515 = vlaneseq
    %v2516 = vshrl.u32 %v2515, 7
    %v2517 = vsub.s32 %v2268, %v2516
    %v2518 = vrot.slane %v1995, %v2517
    %v2519 = vsel %vm2273, %v2518, %v2514
    %v2520 = vlaneseq
    %v2521 = vshrl.u32 %v2520, 7
    %v2522 = vsub.s32 %v2275, %v2521
    %v2523 = vrot.slane %v1996, %v2522
    %v2524 = vsel %vm2280, %v2523, %v2519
    %v2525 = vlaneseq
    %v2526 = vshrl.u32 %v2525, 7
    %v2527 = vsub.s32 %v2282, %v2526
    %v2528 = vrot.slane %v1997, %v2527
    %v2529 = vsel %vm2287, %v2528, %v2524
    %v2530 = vlaneseq
    %v2531 = vshrl.u32 %v2530, 7
    %v2532 = vsub.s32 %v2289, %v2531
    %v2533 = vrot.slane %v1998, %v2532
    %v2534 = vsel %vm2294, %v2533, %v2529
    %v2535 = vlaneseq
    %v2536 = vshrl.u32 %v2535, 7
    %v2537 = vsub.s32 %v2296, %v2536
    %v2538 = vrot.slane %v1999, %v2537
    %v2539 = vsel %vm2301, %v2538, %v2534
    %v2540 = vlaneseq
    %v2541 = vshrl.u32 %v2540, 7
    %v2542 = vsub.s32 %v2193, %v2541
    %v2543 = vrot.slane %v2000, %v2542
    %v2544 = vlaneseq
    %v2545 = vshrl.u32 %v2544, 7
    %v2546 = vsub.s32 %v2198, %v2545
    %v2547 = vrot.slane %v2001, %v2546
    %v2548 = vsel %vm2203, %v2547, %v2543
    %v2549 = vlaneseq
    %v2550 = vshrl.u32 %v2549, 7
    %v2551 = vsub.s32 %v2205, %v2550
    %v2552 = vrot.slane %v2002, %v2551
    %v2553 = vsel %vm2210, %v2552, %v2548
    %v2554 = vlaneseq
    %v2555 = vshrl.u32 %v2554, 7
    %v2556 = vsub.s32 %v2212, %v2555
    %v2557 = vrot.slane %v2003, %v2556
    %v2558 = vsel %vm2217, %v2557, %v2553
    %v2559 = vlaneseq
    %v2560 = vshrl.u32 %v2559, 7
    %v2561 = vsub.s32 %v2219, %v2560
    %v2562 = vrot.slane %v2004, %v2561
    %v2563 = vsel %vm2224, %v2562, %v2558
    %v2564 = vlaneseq
    %v2565 = vshrl.u32 %v2564, 7
    %v2566 = vsub.s32 %v2226, %v2565
    %v2567 = vrot.slane %v2005, %v2566
    %v2568 = vsel %vm2231, %v2567, %v2563
    %v2569 = vlaneseq
    %v2570 = vshrl.u32 %v2569, 7
    %v2571 = vsub.s32 %v2233, %v2570
    %v2572 = vrot.slane %v2006, %v2571
    %v2573 = vsel %vm2238, %v2572, %v2568
    %v2574 = vlaneseq
    %v2575 = vshrl.u32 %v2574, 7
    %v2576 = vsub.s32 %v2240, %v2575
    %v2577 = vrot.slane %v2007, %v2576
    %v2578 = vsel %vm2245, %v2577, %v2573
    %v2579 = vlaneseq
    %v2580 = vshrl.u32 %v2579, 7
    %v2581 = vsub.s32 %v2247, %v2580
    %v2582 = vrot.slane %v2008, %v2581
    %v2583 = vsel %vm2252, %v2582, %v2578
    %v2584 = vlaneseq
    %v2585 = vshrl.u32 %v2584, 7
    %v2586 = vsub.s32 %v2254, %v2585
    %v2587 = vrot.slane %v2009, %v2586
    %v2588 = vsel %vm2259, %v2587, %v2583
    %v2589 = vlaneseq
    %v2590 = vshrl.u32 %v2589, 7
    %v2591 = vsub.s32 %v2261, %v2590
    %v2592 = vrot.slane %v2010, %v2591
    %v2593 = vsel %vm2266, %v2592, %v2588
    %v2594 = vlaneseq
    %v2595 = vshrl.u32 %v2594, 7
    %v2596 = vsub.s32 %v2268, %v2595
    %v2597 = vrot.slane %v2011, %v2596
    %v2598 = vsel %vm2273, %v2597, %v2593
    %v2599 = vlaneseq
    %v2600 = vshrl.u32 %v2599, 7
    %v2601 = vsub.s32 %v2275, %v2600
    %v2602 = vrot.slane %v2012, %v2601
    %v2603 = vsel %vm2280, %v2602, %v2598
    %v2604 = vlaneseq
    %v2605 = vshrl.u32 %v2604, 7
    %v2606 = vsub.s32 %v2282, %v2605
    %v2607 = vrot.slane %v2013, %v2606
    %v2608 = vsel %vm2287, %v2607, %v2603
    %v2609 = vlaneseq
    %v2610 = vshrl.u32 %v2609, 7
    %v2611 = vsub.s32 %v2289, %v2610
    %v2612 = vrot.slane %v2014, %v2611
    %v2613 = vsel %vm2294, %v2612, %v2608
    %v2614 = vlaneseq
    %v2615 = vshrl.u32 %v2614, 7
    %v2616 = vsub.s32 %v2296, %v2615
    %v2617 = vrot.slane %v2015, %v2616
    %v2618 = vsel %vm2301, %v2617, %v2613
    %v2619 = vlaneseq
    %v2620 = vshrl.u32 %v2619, 7
    %v2621 = vsub.s32 %v2193, %v2620
    %v2622 = vrot.slane %v2016, %v2621
    %v2623 = vlaneseq
    %v2624 = vshrl.u32 %v2623, 7
    %v2625 = vsub.s32 %v2198, %v2624
    %v2626 = vrot.slane %v2017, %v2625
    %v2627 = vsel %vm2203, %v2626, %v2622
    %v2628 = vlaneseq
    %v2629 = vshrl.u32 %v2628, 7
    %v2630 = vsub.s32 %v2205, %v2629
    %v2631 = vrot.slane %v2018, %v2630
    %v2632 = vsel %vm2210, %v2631, %v2627
    %v2633 = vlaneseq
    %v2634 = vshrl.u32 %v2633, 7
    %v2635 = vsub.s32 %v2212, %v2634
    %v2636 = vrot.slane %v2019, %v2635
    %v2637 = vsel %vm2217, %v2636, %v2632
    %v2638 = vlaneseq
    %v2639 = vshrl.u32 %v2638, 7
    %v2640 = vsub.s32 %v2219, %v2639
    %v2641 = vrot.slane %v2020, %v2640
    %v2642 = vsel %vm2224, %v2641, %v2637
    %v2643 = vlaneseq
    %v2644 = vshrl.u32 %v2643, 7
    %v2645 = vsub.s32 %v2226, %v2644
    %v2646 = vrot.slane %v2021, %v2645
    %v2647 = vsel %vm2231, %v2646, %v2642
    %v2648 = vlaneseq
    %v2649 = vshrl.u32 %v2648, 7
    %v2650 = vsub.s32 %v2233, %v2649
    %v2651 = vrot.slane %v2022, %v2650
    %v2652 = vsel %vm2238, %v2651, %v2647
    %v2653 = vlaneseq
    %v2654 = vshrl.u32 %v2653, 7
    %v2655 = vsub.s32 %v2240, %v2654
    %v2656 = vrot.slane %v2023, %v2655
    %v2657 = vsel %vm2245, %v2656, %v2652
    %v2658 = vlaneseq
    %v2659 = vshrl.u32 %v2658, 7
    %v2660 = vsub.s32 %v2247, %v2659
    %v2661 = vrot.slane %v2024, %v2660
    %v2662 = vsel %vm2252, %v2661, %v2657
    %v2663 = vlaneseq
    %v2664 = vshrl.u32 %v2663, 7
    %v2665 = vsub.s32 %v2254, %v2664
    %v2666 = vrot.slane %v2025, %v2665
    %v2667 = vsel %vm2259, %v2666, %v2662
    %v2668 = vlaneseq
    %v2669 = vshrl.u32 %v2668, 7
    %v2670 = vsub.s32 %v2261, %v2669
    %v2671 = vrot.slane %v2026, %v2670
    %v2672 = vsel %vm2266, %v2671, %v2667
    %v2673 = vlaneseq
    %v2674 = vshrl.u32 %v2673, 7
    %v2675 = vsub.s32 %v2268, %v2674
    %v2676 = vrot.slane %v2027, %v2675
    %v2677 = vsel %vm2273, %v2676, %v2672
    %v2678 = vlaneseq
    %v2679 = vshrl.u32 %v2678, 7
    %v2680 = vsub.s32 %v2275, %v2679
    %v2681 = vrot.slane %v2028, %v2680
    %v2682 = vsel %vm2280, %v2681, %v2677
    %v2683 = vlaneseq
    %v2684 = vshrl.u32 %v2683, 7
    %v2685 = vsub.s32 %v2282, %v2684
    %v2686 = vrot.slane %v2029, %v2685
    %v2687 = vsel %vm2287, %v2686, %v2682
    %v2688 = vlaneseq
    %v2689 = vshrl.u32 %v2688, 7
    %v2690 = vsub.s32 %v2289, %v2689
    %v2691 = vrot.slane %v2030, %v2690
    %v2692 = vsel %vm2294, %v2691, %v2687
    %v2693 = vlaneseq
    %v2694 = vshrl.u32 %v2693, 7
    %v2695 = vsub.s32 %v2296, %v2694
    %v2696 = vrot.slane %v2031, %v2695
    %v2697 = vsel %vm2301, %v2696, %v2692
    %v2698 = vlaneseq
    %v2699 = vshrl.u32 %v2698, 7
    %v2700 = vsub.s32 %v2193, %v2699
    %v2701 = vrot.slane %v2032, %v2700
    %v2702 = vlaneseq
    %v2703 = vshrl.u32 %v2702, 7
    %v2704 = vsub.s32 %v2198, %v2703
    %v2705 = vrot.slane %v2033, %v2704
    %v2706 = vsel %vm2203, %v2705, %v2701
    %v2707 = vlaneseq
    %v2708 = vshrl.u32 %v2707, 7
    %v2709 = vsub.s32 %v2205, %v2708
    %v2710 = vrot.slane %v2034, %v2709
    %v2711 = vsel %vm2210, %v2710, %v2706
    %v2712 = vlaneseq
    %v2713 = vshrl.u32 %v2712, 7
    %v2714 = vsub.s32 %v2212, %v2713
    %v2715 = vrot.slane %v2035, %v2714
    %v2716 = vsel %vm2217, %v2715, %v2711
    %v2717 = vlaneseq
    %v2718 = vshrl.u32 %v2717, 7
    %v2719 = vsub.s32 %v2219, %v2718
    %v2720 = vrot.slane %v2036, %v2719
    %v2721 = vsel %vm2224, %v2720, %v2716
    %v2722 = vlaneseq
    %v2723 = vshrl.u32 %v2722, 7
    %v2724 = vsub.s32 %v2226, %v2723
    %v2725 = vrot.slane %v2037, %v2724
    %v2726 = vsel %vm2231, %v2725, %v2721
    %v2727 = vlaneseq
    %v2728 = vshrl.u32 %v2727, 7
    %v2729 = vsub.s32 %v2233, %v2728
    %v2730 = vrot.slane %v2038, %v2729
    %v2731 = vsel %vm2238, %v2730, %v2726
    %v2732 = vlaneseq
    %v2733 = vshrl.u32 %v2732, 7
    %v2734 = vsub.s32 %v2240, %v2733
    %v2735 = vrot.slane %v2039, %v2734
    %v2736 = vsel %vm2245, %v2735, %v2731
    %v2737 = vlaneseq
    %v2738 = vshrl.u32 %v2737, 7
    %v2739 = vsub.s32 %v2247, %v2738
    %v2740 = vrot.slane %v2040, %v2739
    %v2741 = vsel %vm2252, %v2740, %v2736
    %v2742 = vlaneseq
    %v2743 = vshrl.u32 %v2742, 7
    %v2744 = vsub.s32 %v2254, %v2743
    %v2745 = vrot.slane %v2041, %v2744
    %v2746 = vsel %vm2259, %v2745, %v2741
    %v2747 = vlaneseq
    %v2748 = vshrl.u32 %v2747, 7
    %v2749 = vsub.s32 %v2261, %v2748
    %v2750 = vrot.slane %v2042, %v2749
    %v2751 = vsel %vm2266, %v2750, %v2746
    %v2752 = vlaneseq
    %v2753 = vshrl.u32 %v2752, 7
    %v2754 = vsub.s32 %v2268, %v2753
    %v2755 = vrot.slane %v2043, %v2754
    %v2756 = vsel %vm2273, %v2755, %v2751
    %v2757 = vlaneseq
    %v2758 = vshrl.u32 %v2757, 7
    %v2759 = vsub.s32 %v2275, %v2758
    %v2760 = vrot.slane %v2044, %v2759
    %v2761 = vsel %vm2280, %v2760, %v2756
    %v2762 = vlaneseq
    %v2763 = vshrl.u32 %v2762, 7
    %v2764 = vsub.s32 %v2282, %v2763
    %v2765 = vrot.slane %v2045, %v2764
    %v2766 = vsel %vm2287, %v2765, %v2761
    %v2767 = vlaneseq
    %v2768 = vshrl.u32 %v2767, 7
    %v2769 = vsub.s32 %v2289, %v2768
    %v2770 = vrot.slane %v2046, %v2769
    %v2771 = vsel %vm2294, %v2770, %v2766
    %v2772 = vlaneseq
    %v2773 = vshrl.u32 %v2772, 7
    %v2774 = vsub.s32 %v2296, %v2773
    %v2775 = vrot.slane %v2047, %v2774
    %v2776 = vsel %vm2301, %v2775, %v2771
    %v2777 = vlaneseq
    %v2778 = vshrl.u32 %v2777, 7
    %v2779 = vsub.s32 %v2193, %v2778
    %v2780 = vrot.slane %v2048, %v2779
    %v2781 = vlaneseq
    %v2782 = vshrl.u32 %v2781, 7
    %v2783 = vsub.s32 %v2198, %v2782
    %v2784 = vrot.slane %v2049, %v2783
    %v2785 = vsel %vm2203, %v2784, %v2780
    %v2786 = vlaneseq
    %v2787 = vshrl.u32 %v2786, 7
    %v2788 = vsub.s32 %v2205, %v2787
    %v2789 = vrot.slane %v2050, %v2788
    %v2790 = vsel %vm2210, %v2789, %v2785
    %v2791 = vlaneseq
    %v2792 = vshrl.u32 %v2791, 7
    %v2793 = vsub.s32 %v2212, %v2792
    %v2794 = vrot.slane %v2051, %v2793
    %v2795 = vsel %vm2217, %v2794, %v2790
    %v2796 = vlaneseq
    %v2797 = vshrl.u32 %v2796, 7
    %v2798 = vsub.s32 %v2219, %v2797
    %v2799 = vrot.slane %v2052, %v2798
    %v2800 = vsel %vm2224, %v2799, %v2795
    %v2801 = vlaneseq
    %v2802 = vshrl.u32 %v2801, 7
    %v2803 = vsub.s32 %v2226, %v2802
    %v2804 = vrot.slane %v2053, %v2803
    %v2805 = vsel %vm2231, %v2804, %v2800
    %v2806 = vlaneseq
    %v2807 = vshrl.u32 %v2806, 7
    %v2808 = vsub.s32 %v2233, %v2807
    %v2809 = vrot.slane %v2054, %v2808
    %v2810 = vsel %vm2238, %v2809, %v2805
    %v2811 = vlaneseq
    %v2812 = vshrl.u32 %v2811, 7
    %v2813 = vsub.s32 %v2240, %v2812
    %v2814 = vrot.slane %v2055, %v2813
    %v2815 = vsel %vm2245, %v2814, %v2810
    %v2816 = vlaneseq
    %v2817 = vshrl.u32 %v2816, 7
    %v2818 = vsub.s32 %v2247, %v2817
    %v2819 = vrot.slane %v2056, %v2818
    %v2820 = vsel %vm2252, %v2819, %v2815
    %v2821 = vlaneseq
    %v2822 = vshrl.u32 %v2821, 7
    %v2823 = vsub.s32 %v2254, %v2822
    %v2824 = vrot.slane %v2057, %v2823
    %v2825 = vsel %vm2259, %v2824, %v2820
    %v2826 = vlaneseq
    %v2827 = vshrl.u32 %v2826, 7
    %v2828 = vsub.s32 %v2261, %v2827
    %v2829 = vrot.slane %v2058, %v2828
    %v2830 = vsel %vm2266, %v2829, %v2825
    %v2831 = vlaneseq
    %v2832 = vshrl.u32 %v2831, 7
    %v2833 = vsub.s32 %v2268, %v2832
    %v2834 = vrot.slane %v2059, %v2833
    %v2835 = vsel %vm2273, %v2834, %v2830
    %v2836 = vlaneseq
    %v2837 = vshrl.u32 %v2836, 7
    %v2838 = vsub.s32 %v2275, %v2837
    %v2839 = vrot.slane %v2060, %v2838
    %v2840 = vsel %vm2280, %v2839, %v2835
    %v2841 = vlaneseq
    %v2842 = vshrl.u32 %v2841, 7
    %v2843 = vsub.s32 %v2282, %v2842
    %v2844 = vrot.slane %v2061, %v2843
    %v2845 = vsel %vm2287, %v2844, %v2840
    %v2846 = vlaneseq
    %v2847 = vshrl.u32 %v2846, 7
    %v2848 = vsub.s32 %v2289, %v2847
    %v2849 = vrot.slane %v2062, %v2848
    %v2850 = vsel %vm2294, %v2849, %v2845
    %v2851 = vlaneseq
    %v2852 = vshrl.u32 %v2851, 7
    %v2853 = vsub.s32 %v2296, %v2852
    %v2854 = vrot.slane %v2063, %v2853
    %v2855 = vsel %vm2301, %v2854, %v2850
    %vm2856 = vcmask 1041409
    %v2857 = vsel %vm2856, %v2381, %v2302
    %vm2858 = vcmask 1042434
    %v2859 = vsel %vm2858, %v2460, %v2857
    %vm2860 = vcmask 1043459
    %v2861 = vsel %vm2860, %v2539, %v2859
    %vm2862 = vcmask 1044484
    %v2863 = vsel %vm2862, %v2618, %v2861
    %vm2864 = vcmask 1045509
    %v2865 = vsel %vm2864, %v2697, %v2863
    %vm2866 = vcmask 1046534
    %v2867 = vsel %vm2866, %v2776, %v2865
    %vm2868 = vcmask 1047559
    %v2869 = vsel %vm2868, %v2855, %v2867
    %2871 = vst [vmem:[#allocation8] sm:$0xff] %v2869
    // Predicated region
    $region30: #{tpu_custom_call.1} parent=1 // pred_check
      _
    $region31: #{tpu_custom_call.1} parent=1 // pred_check_branch
      %2873 = sbr.rel (0) target = $region33
    $region32: #{tpu_custom_call.1} parent=1 // pred_region
      %s2875 = ssub.s32 128, 16
      %2876 = vsyncadd [#allocation5], %s2875
      %s2877 = sshll.u32 [#allocation8], 4
      %s2878 = int_to_ptr.vmem [resolvable:$true] %s2877
      %2883 = dma.vmem_to_hbm [thread:$0]  %s2878, 16, %s5, [#allocation5], 16, 16, 1
    $region33: #{tpu_custom_call.1} parent=1 // pred_fallthru
      _
    // Predicated region
    $region34: #{tpu_custom_call.1} parent=1 // pred_check
      _
    $region35: #{tpu_custom_call.1} parent=1 // pred_check_branch
      %2885 = sbr.rel (0) target = $region37
    $region36: #{tpu_custom_call.1} parent=1 // pred_region
      %2886 = dma.done [#allocation5], 128
    $region37: #{tpu_custom_call.1} parent=1 // pred_fallthru
      _
    %2887 = vsyncpa [#allocation4], 1
    %2888 = vsyncpa [#allocation7], 1
    %2889 = vsyncpa [#allocation5], 1

</llo_original>
